<compile_context>
chip_gen: v6e
topology: v6e:2x2x1
jax: 0.10.0
libtpu: 0.0.40
codegen_flags: <defaults>
</compile_context>

<pallas_src>
import functools
import math

import jax
import jax.numpy as jnp
from jax import lax
from jax.experimental import pallas as pl
from jax.experimental.pallas import tpu as pltpu


# ------------------------------- small helpers --------------------------------

def _round_up(x, m):
    return ((x + m - 1) // m) * m


def _pick_tile(dim, target, align):
    """Largest tile <= target that divides `dim` and is `align`-aligned.
    Falls back to the full dimension (always a legal Mosaic block size)."""
    if dim <= target:
        return dim
    t = (target // align) * align
    while t >= align:
        if dim % t == 0:
            return t
        t -= align
    return dim


def _halve_tile(t):
    return max(16, ((t // 2) // 16) * 16)


def _vmem_budget_bytes():
    """Generation-aware scoped-VMEM budget.

    Queries the chip when possible (128 MiB on v5e/v6e, 64 MiB per TC on v7x) and
    falls back to the tightest generation (v7x) so the kernel never over-commits."""
    cap = 64 * 1024 * 1024
    try:
        info = pltpu.get_tpu_info()
        for attr in ("vmem_capacity_bytes", "vmem_bytes", "vmem_size_bytes"):
            val = getattr(info, attr, None)
            if isinstance(val, int) and val > 0:
                cap = val
                break
    except Exception:  # best-effort query; keep the conservative fallback
        pass
    budget = int(cap * 0.7)                       # leave headroom for compiler scratch
    return max(32 * 1024 * 1024, min(budget, 100 * 1024 * 1024))


# ----------------------------- linear (x @ W + b) ------------------------------

def _linear_kernel(x_ref, w_ref, b_ref, o_ref, acc_ref):
    @pl.when(pl.program_id(2) == 0)
    def _():
        acc_ref[...] = jnp.zeros_like(acc_ref)

    # Operands already arrive in bf16 (cast once outside the kernel); the MXU
    # accumulates in f32 -> no per-step VALU cast work, half the weight DMA.
    acc_ref[...] += jnp.dot(x_ref[...], w_ref[...],
                            preferred_element_type=jnp.float32)

    @pl.when(pl.program_id(2) == pl.num_programs(2) - 1)
    def _():
        o_ref[...] = (acc_ref[...] + b_ref[...].astype(jnp.float32)).astype(o_ref.dtype)


def linear(x2d, w, b, out_dtype):
    """x2d: (M, Din) [bf16] @ w: (Din, Dout) [bf16] + b: (1, Dout) [f32]."""
    M, Din = x2d.shape
    Dout = w.shape[1]
    budget = _vmem_budget_bytes()
    m_target = 512 if budget >= 64 * 1024 * 1024 else 256

    tm = min(m_target, _round_up(M, 16))          # bf16 sublane packing -> 16-aligned
    Mp = _round_up(M, tm)
    tn = _pick_tile(Dout, 256, 128)
    tk = _pick_tile(Din, 512, 128)

    if Mp != M:
        x2d = jnp.pad(x2d, ((0, Mp - M), (0, 0)))

    grid = (Mp // tm, Dout // tn, Din // tk)
    out = pl.pallas_call(
        _linear_kernel,
        out_shape=jax.ShapeDtypeStruct((Mp, Dout), out_dtype),
        grid=grid,
        in_specs=[
            pl.BlockSpec((tm, tk), lambda i, j, k: (i, k)),
            pl.BlockSpec((tk, tn), lambda i, j, k: (k, j)),
            pl.BlockSpec((1, tn), lambda i, j, k: (0, j)),
        ],
        out_specs=pl.BlockSpec((tm, tn), lambda i, j, k: (i, j)),
        scratch_shapes=[pltpu.VMEM((tm, tn), jnp.float32)],
        compiler_params=pltpu.CompilerParams(
            dimension_semantics=("parallel", "parallel", "arbitrary"),
            vmem_limit_bytes=budget),
    )(x2d, w, b)
    return out[:M] if Mp != M else out


# ----------------- flash-style attention (all heads per batch tile) ------------

def _attn_kernel(q_ref, k_ref, v_ref, o_ref, m_sc, l_sc, acc_sc, *,
                 heads, qk_head, v_head, kv_tile, lk_actual, lk_padded):
    kv = pl.program_id(2)

    @pl.when(kv == 0)
    def _():
        m_sc[...] = jnp.full_like(m_sc, -jnp.inf)
        l_sc[...] = jnp.zeros_like(l_sc)
        acc_sc[...] = jnp.zeros_like(acc_sc)

    q_all = q_ref[...]          # (tq,  H*dqk) bf16, 1/sqrt(d) folded into W_q
    k_all = k_ref[...]          # (tkv, H*dqk) bf16
    v_all = v_ref[...]          # (tkv, H*dv)  bf16

    key_mask = None
    if lk_padded != lk_actual:
        # Mask zero-padded tail keys.  The first kv tile always has real keys,
        # so the running max never stays at -inf -> no NaN from exp.
        key_idx = kv * kv_tile + lax.broadcasted_iota(
            jnp.int32, (q_all.shape[0], k_all.shape[0]), 1)
        key_mask = key_idx < lk_actual

    # TODO(synk): optional attention_mask (masked_fill with -1e20) not wired in.
    # heads is small & static here; for very large head counts move this loop to
    # lax.fori_loop / a grid axis to bound live ranges.
    for h in range(heads):
        q_h = q_all[:, h * qk_head:(h + 1) * qk_head]         # (tq,  dqk)
        k_h = k_all[:, h * qk_head:(h + 1) * qk_head]         # (tkv, dqk)
        v_h = v_all[:, h * v_head:(h + 1) * v_head]           # (tkv, dv)

        # Scores: contract last dims directly (no explicit K transpose).
        s = lax.dot_general(q_h, k_h, (((1,), (1,)), ((), ())),
                            preferred_element_type=jnp.float32)   # (tq, tkv) f32
        if key_mask is not None:
            s = jnp.where(key_mask, s, -1e30)

        m_prev = m_sc[h]                                       # (tq, 1)
        l_prev = l_sc[h]                                       # (tq, 1)
        acc_prev = acc_sc[h]                                   # (tq, dv)

        m_new = jnp.maximum(m_prev, jnp.max(s, axis=-1, keepdims=True))
        alpha = jnp.exp(m_prev - m_new)                        # exp(-inf)=0 at kv==0
        p = jnp.exp(s - m_new)                                 # (tq, tkv) f32
        pv = lax.dot_general(p.astype(jnp.bfloat16), v_h, (((1,), (0,)), ((), ())),
                             preferred_element_type=jnp.float32)  # (tq, dv) f32

        m_sc[h] = m_new
        l_sc[h] = alpha * l_prev + jnp.sum(p, axis=-1, keepdims=True)
        acc_sc[h] = alpha * acc_prev + pv

    @pl.when(kv == pl.num_programs(2) - 1)
    def _():
        outs = []
        for h in range(heads):
            inv_l = pl.reciprocal(l_sc[h], approx=True)        # EUP slot, ~free
            outs.append(acc_sc[h] * inv_l)
        # Assemble once, store once: single lane-dense (tq, H*dv) store.
        o_ref[...] = jnp.concatenate(outs, axis=-1).astype(o_ref.dtype)


def _attn_footprint_bytes(tq, tkv, qk_out, v_out, heads, v_head, out_bytes):
    bf16, f32, lane = 2, 4, 128
    bufs = 2 * (tq * qk_out + tkv * qk_out + tkv * v_out) * bf16   # double-buffered in
    bufs += 2 * tq * v_out * out_bytes                             # double-buffered out
    scr = heads * _round_up(tq, 8) * (lane + lane + _round_up(v_head, lane)) * f32
    inter = 3 * tq * tkv * f32                                     # live s/p temporaries
    return bufs + scr + inter


def attention(q, k, v, heads, qk_head, v_head, out_dtype=jnp.bfloat16):
    """q: (B,Lq,H*dqk), k: (B,Lk,H*dqk), v: (B,Lk,H*dv) -> (B,Lq,H*dv)."""
    B, Lq, qk_out = q.shape
    Lk = k.shape[1]
    v_out = v.shape[2]
    assert k.shape[1] == v.shape[1], "key/value sequence lengths must match"

    budget = _vmem_budget_bytes()
    target = int(budget * 0.8)
    out_bytes = jnp.dtype(out_dtype).itemsize

    tq = min(256, _round_up(Lq, 16))     # bf16 sublane packing -> 16-aligned
    tkv = min(512, _round_up(Lk, 16))
    while (_attn_footprint_bytes(tq, tkv, qk_out, v_out, heads, v_head, out_bytes)
           > target and tkv > 128):
        tkv = _halve_tile(tkv)
    while (_attn_footprint_bytes(tq, tkv, qk_out, v_out, heads, v_head, out_bytes)
           > target and tq > 64):
        tq = _halve_tile(tq)

    # Pad sequences to the tile grid instead of falling back to a full-sequence
    # block (padded keys are masked in-kernel, padded query rows are sliced off).
    Lqp = _round_up(Lq, tq)
    Lkp = _round_up(Lk, tkv)
    if Lqp != Lq:
        q = jnp.pad(q, ((0, 0), (0, Lqp - Lq), (0, 0)))
    if Lkp != Lk:
        k = jnp.pad(k, ((0, 0), (0, Lkp - Lk), (0, 0)))
        v = jnp.pad(v, ((0, 0), (0, Lkp - Lk), (0, 0)))

    grid = (B, Lqp // tq, Lkp // tkv)
    kernel = functools.partial(_attn_kernel, heads=heads, qk_head=qk_head,
                               v_head=v_head, kv_tile=tkv,
                               lk_actual=Lk, lk_padded=Lkp)
    out = pl.pallas_call(
        kernel,
        out_shape=jax.ShapeDtypeStruct((B, Lqp, v_out), out_dtype),
        grid=grid,
        in_specs=[
            pl.BlockSpec((None, tq, qk_out), lambda b, qi, ki: (b, qi, 0)),
            pl.BlockSpec((None, tkv, qk_out), lambda b, qi, ki: (b, ki, 0)),
            pl.BlockSpec((None, tkv, v_out), lambda b, qi, ki: (b, ki, 0)),
        ],
        out_specs=pl.BlockSpec((None, tq, v_out), lambda b, qi, ki: (b, qi, 0)),
        scratch_shapes=[
            pltpu.VMEM((heads, tq, 1), jnp.float32),        # running max per head
            pltpu.VMEM((heads, tq, 1), jnp.float32),        # running denom per head
            pltpu.VMEM((heads, tq, v_head), jnp.float32),   # running numerator per head
        ],
        compiler_params=pltpu.CompilerParams(
            dimension_semantics=("parallel", "parallel", "arbitrary"),
            vmem_limit_bytes=budget),
    )(q, k, v)
    return out[:, :Lq] if Lqp != Lq else out


# ------------------------------- module wrapper --------------------------------

def init_mha_params(key, q_dim, kv_dim, qk_out_dim=None, v_out_dim=None,
                    output_dim=None):
    if qk_out_dim is None:
        qk_out_dim = q_dim
    if v_out_dim is None:
        v_out_dim = qk_out_dim
    if output_dim is None:
        output_dim = v_out_dim

    def linear_init(k, din, dout):
        k1, k2 = jax.random.split(k)
        bound = 1.0 / math.sqrt(din)
        w = jax.random.uniform(k1, (din, dout), jnp.float32, -bound, bound)
        b = jax.random.uniform(k2, (1, dout), jnp.float32, -bound, bound)
        return w, b

    kq, kk, kv, ko = jax.random.split(key, 4)
    return {
        "q": linear_init(kq, q_dim, qk_out_dim),
        "k": linear_init(kk, kv_dim, qk_out_dim),
        "v": linear_init(kv, kv_dim, v_out_dim),
        "o": linear_init(ko, v_out_dim, output_dim),
    }


def prepare_params(params, heads):
    """One-time prep: cast weights to bf16 and fold 1/sqrt(qk_head) into W_q/b_q."""
    wq, bq = params["q"]
    wk, bk = params["k"]
    wv, bv = params["v"]
    wo, bo = params["o"]
    qk_head = wq.shape[1] // heads
    scale = 1.0 / math.sqrt(qk_head)
    return {
        "q": ((wq * scale).astype(jnp.bfloat16), (bq * scale).astype(jnp.float32)),
        "k": (wk.astype(jnp.bfloat16), bk.astype(jnp.float32)),
        "v": (wv.astype(jnp.bfloat16), bv.astype(jnp.float32)),
        "o": (wo.astype(jnp.bfloat16), bo.astype(jnp.float32)),
    }


def mha_forward(params, x_q, x_k=None, x_v=None, *, heads):
    """Pallas MHA forward.  Pass x_k=None for self-attention, x_v=None to reuse x_k."""
    if x_k is None:
        x_k = x_q
    if x_v is None:
        x_v = x_k
    B, Lq, _ = x_q.shape
    Lk = x_k.shape[1]
    Lv = x_v.shape[1]
    assert Lk == Lv, "key/value sequence lengths must match"

    wq, bq = params["q"]
    wk, bk = params["k"]
    wv, bv = params["v"]
    wo, bo = params["o"]

    qk_out = wq.shape[1]
    v_out = wv.shape[1]
    assert qk_out % heads == 0 and v_out % heads == 0
    qk_head = qk_out // heads
    v_head = v_out // heads

    # bf16 activations: half the projection / attention HBM traffic.
    xq2 = x_q.reshape(B * Lq, -1).astype(jnp.bfloat16)
    xk2 = x_k.reshape(B * Lk, -1).astype(jnp.bfloat16)
    xv2 = x_v.reshape(B * Lv, -1).astype(jnp.bfloat16)

    if (x_q is x_k) and (x_k is x_v):
        # Self-attention: fused Q|K|V projection (one activation read, one launch).
        w = jnp.concatenate([wq, wk, wv], axis=1)
        b = jnp.concatenate([bq, bk, bv], axis=1)
        qkv = linear(xq2, w, b, jnp.bfloat16)
        q = qkv[:, :qk_out].reshape(B, Lq, qk_out)
        k = qkv[:, qk_out:2 * qk_out].reshape(B, Lk, qk_out)
        v = qkv[:, 2 * qk_out:].reshape(B, Lk, v_out)
    elif x_k is x_v:
        # Cross-attention with shared K/V input: fused K|V projection.
        q = linear(xq2, wq, bq, jnp.bfloat16).reshape(B, Lq, qk_out)
        w = jnp.concatenate([wk, wv], axis=1)
        b = jnp.concatenate([bk, bv], axis=1)
        kvp = linear(xk2, w, b, jnp.bfloat16)
        k = kvp[:, :qk_out].reshape(B, Lk, qk_out)
        v = kvp[:, qk_out:].reshape(B, Lk, v_out)
    else:
        q = linear(xq2, wq, bq, jnp.bfloat16).reshape(B, Lq, qk_out)
        k = linear(xk2, wk, bk, jnp.bfloat16).reshape(B, Lk, qk_out)
        v = linear(xv2, wv, bv, jnp.bfloat16).reshape(B, Lv, v_out)

    # Heads stay packed on the feature axis -> no (B,H,L,d) HBM transposes.
    o = attention(q, k, v, heads, qk_head, v_head, out_dtype=jnp.bfloat16)

    out = linear(o.reshape(B * Lq, v_out), wo, bo, jnp.float32).reshape(B, Lq, -1)
    return out


# ----------------------------- pure-JAX reference ------------------------------

def mha_reference(params, x_q, x_k, x_v, heads):
    wq, bq = params["q"]
    wk, bk = params["k"]
    wv, bv = params["v"]
    wo, bo = params["o"]
    B, Lq, _ = x_q.shape
    Lk = x_k.shape[1]
    qk_head = wq.shape[1] // heads
    v_head = wv.shape[1] // heads

    q = (x_q @ wq + bq[0]).reshape(B, Lq, heads, qk_head)
    k = (x_k @ wk + bk[0]).reshape(B, Lk, heads, qk_head)
    v = (x_v @ wv + bv[0]).reshape(B, Lk, heads, v_head)
    energy = jnp.einsum("nqhd,nkhd->nhqk", q, k)
    attn = jax.nn.softmax(energy / math.sqrt(qk_head), axis=3)
    out = jnp.einsum("nhql,nlhd->nqhd", attn, v).reshape(B, Lq, heads * v_head)
    return out @ wo + bo[0]


# ------------------------------------ main --------------------------------------

if __name__ == "__main__":
    B, Lq, Lkv = 2, 8, 8
    q_dim, kv_dim = 32, 32
    heads = 4

    root = jax.random.PRNGKey(0)
    kp, kq, kk, kv_ = jax.random.split(root, 4)
    params = init_mha_params(kp, q_dim, kv_dim)
    prepared = prepare_params(params, heads)

    x_q = jax.random.normal(kq, (B, Lq, q_dim), jnp.float32)
    x_k = jax.random.normal(kk, (B, Lkv, kv_dim), jnp.float32)
    x_v = jax.random.normal(kv_, (B, Lkv, kv_dim), jnp.float32)

    fwd = jax.jit(mha_forward, static_argnames=("heads",))

    # Case 1: cross-attention with shared K/V input -> fused K|V projection path.
    out1 = fwd(prepared, x_q, x_k, heads=heads)        # x_v defaults to x_k
    jax.block_until_ready(out1)
    ref1 = mha_reference(params, x_q, x_k, x_k, heads)
    assert out1.shape == ref1.shape, (out1.shape, ref1.shape)
    err1 = float(jnp.max(jnp.abs(out1 - ref1)))
    assert err1 < 5e-2, f"shared-KV mismatch vs reference: max abs err {err1}"

    # Case 2: fully distinct Q/K/V inputs -> separate projections path.
    out2 = fwd(prepared, x_q, x_k, x_v, heads=heads)
    jax.block_until_ready(out2)
    ref2 = mha_reference(params, x_q, x_k, x_v, heads)
    assert out2.shape == ref2.shape, (out2.shape, ref2.shape)
    err2 = float(jnp.max(jnp.abs(out2 - ref2)))
    assert err2 < 5e-2, f"distinct-QKV mismatch vs reference: max abs err {err2}"

    print("KERNEL_OK")
</pallas_src>

<mosaic_0001>
module attributes {stable_mosaic.version = 11 : i64} {
  func.func @_linear_kernel(%arg0: i32, %arg1: i32, %arg2: i32, %arg3: memref<16x32xbf16, #tpu.memory_space<vmem>>, %arg4: memref<32x32xbf16, #tpu.memory_space<vmem>>, %arg5: memref<1x32xf32, #tpu.memory_space<vmem>>, %arg6: memref<16x32xbf16, #tpu.memory_space<vmem>>, %arg7: memref<16x32xf32, #tpu.memory_space<vmem>>) attributes {dimension_semantics = [#tpu.dimension_semantics<parallel>, #tpu.dimension_semantics<parallel>, #tpu.dimension_semantics<arbitrary>], iteration_bounds = array<i64: 1, 1, 1>, scalar_prefetch = 0 : i64, scratch_operands = 1 : i64, tpu.core_type = #tpu.core_type<tc>, window_params = [{transform_indices = @transform_0, window_bounds = array<i64: 16, 32>}, {transform_indices = @transform_1, window_bounds = array<i64: 32, 32>}, {transform_indices = @transform_2, window_bounds = array<i64: 1, 32>}, {transform_indices = @transform_3, window_bounds = array<i64: 16, 32>}]} {
    %c0_i32 = arith.constant 0 : i32
    %0 = arith.cmpi eq, %arg2, %c0_i32 : i32
    %1 = arith.extui %0 : i1 to i32
    %c0_i32_0 = arith.constant 0 : i32
    %2 = arith.cmpi ne, %1, %c0_i32_0 : i32
    scf.if %2 {
      %cst_10 = arith.constant 0.000000e+00 : f32
      %12 = vector.broadcast %cst_10 : f32 to vector<16x32xf32>
      %c0_11 = arith.constant 0 : index
      %c0_12 = arith.constant 0 : index
      %13 = vector.load %arg7[%c0_11, %c0_12] : memref<16x32xf32, #tpu.memory_space<vmem>>, vector<16x32xf32>
      tpu.vector_store %arg7[%c0_11, %c0_12], %12 {strides = array<i32>} : memref<16x32xf32, #tpu.memory_space<vmem>>, vector<16x32xf32>,
    } else {
    }
    %c0 = arith.constant 0 : index
    %c0_1 = arith.constant 0 : index
    %3 = vector.load %arg7[%c0, %c0_1] : memref<16x32xf32, #tpu.memory_space<vmem>>, vector<16x32xf32>
    %c0_2 = arith.constant 0 : index
    %c0_3 = arith.constant 0 : index
    %4 = vector.load %arg3[%c0_2, %c0_3] : memref<16x32xbf16, #tpu.memory_space<vmem>>, vector<16x32xbf16>
    %c0_4 = arith.constant 0 : index
    %c0_5 = arith.constant 0 : index
    %5 = vector.load %arg4[%c0_4, %c0_5] : memref<32x32xbf16, #tpu.memory_space<vmem>>, vector<32x32xbf16>
    %cst = arith.constant dense<0.000000e+00> : vector<16x32xf32>
    %6 = tpu.matmul %4, %5, %cst {dimension_numbers = #tpu.dot_dimension_numbers<[1], [0], [0], [1], [0, 0, 1, 1], [], []>} : vector<16x32xbf16>, vector<32x32xbf16>, vector<16x32xf32> -> vector<16x32xf32>
    %7 = arith.addf %3, %6 : vector<16x32xf32>
    %c0_6 = arith.constant 0 : index
    %c0_7 = arith.constant 0 : index
    %8 = vector.load %arg7[%c0_6, %c0_7] : memref<16x32xf32, #tpu.memory_space<vmem>>, vector<16x32xf32>
    tpu.vector_store %arg7[%c0_6, %c0_7], %7 {strides = array<i32>} : memref<16x32xf32, #tpu.memory_space<vmem>>, vector<16x32xf32>,
    %c0_i32_8 = arith.constant 0 : i32
    %9 = arith.cmpi eq, %arg2, %c0_i32_8 : i32
    %10 = arith.extui %9 : i1 to i32
    %c0_i32_9 = arith.constant 0 : i32
    %11 = arith.cmpi ne, %10, %c0_i32_9 : i32
    scf.if %11 {
      %c0_10 = arith.constant 0 : index
      %c0_11 = arith.constant 0 : index
      %12 = vector.load %arg7[%c0_10, %c0_11] : memref<16x32xf32, #tpu.memory_space<vmem>>, vector<16x32xf32>
      %c0_12 = arith.constant 0 : index
      %c0_13 = arith.constant 0 : index
      %13 = vector.load %arg5[%c0_12, %c0_13] : memref<1x32xf32, #tpu.memory_space<vmem>>, vector<1x32xf32>
      %14 = vector.broadcast %13 : vector<1x32xf32> to vector<16x32xf32>
      %15 = arith.addf %12, %14 : vector<16x32xf32>
      %16 = arith.truncf %15 : vector<16x32xf32> to vector<16x32xbf16>
      %c0_14 = arith.constant 0 : index
      %c0_15 = arith.constant 0 : index
      %17 = vector.load %arg6[%c0_14, %c0_15] : memref<16x32xbf16, #tpu.memory_space<vmem>>, vector<16x32xbf16>
      tpu.vector_store %arg6[%c0_14, %c0_15], %16 {strides = array<i32>} : memref<16x32xbf16, #tpu.memory_space<vmem>>, vector<16x32xbf16>,
    } else {
    }
    return
  }
  func.func @transform_0(%arg0: i32, %arg1: i32, %arg2: i32) -> (i32, i32) {
    %c0_i32 = arith.constant 0 : i32
    return %arg0, %arg2 : i32, i32
  }
  func.func @transform_1(%arg0: i32, %arg1: i32, %arg2: i32) -> (i32, i32) {
    %c0_i32 = arith.constant 0 : i32
    return %arg2, %arg1 : i32, i32
  }
  func.func @transform_2(%arg0: i32, %arg1: i32, %arg2: i32) -> (i32, i32) {
    %c0_i32 = arith.constant 0 : i32
    %c0_i32_0 = arith.constant 0 : i32
    return %c0_i32, %arg1 : i32, i32
  }
  func.func @transform_3(%arg0: i32, %arg1: i32, %arg2: i32) -> (i32, i32) {
    %c0_i32 = arith.constant 0 : i32
    return %arg0, %arg1 : i32, i32
  }
}

module attributes {stable_mosaic.version = 11 : i64} {
  func.func @_linear_kernel(%arg0: i32, %arg1: i32, %arg2: i32, %arg3: memref<16x32xbf16, #tpu.memory_space<vmem>>, %arg4: memref<32x64xbf16, #tpu.memory_space<vmem>>, %arg5: memref<1x64xf32, #tpu.memory_space<vmem>>, %arg6: memref<16x64xbf16, #tpu.memory_space<vmem>>, %arg7: memref<16x64xf32, #tpu.memory_space<vmem>>) attributes {dimension_semantics = [#tpu.dimension_semantics<parallel>, #tpu.dimension_semantics<parallel>, #tpu.dimension_semantics<arbitrary>], iteration_bounds = array<i64: 1, 1, 1>, scalar_prefetch = 0 : i64, scratch_operands = 1 : i64, tpu.core_type = #tpu.core_type<tc>, window_params = [{transform_indices = @transform_0, window_bounds = array<i64: 16, 32>}, {transform_indices = @transform_1, window_bounds = array<i64: 32, 64>}, {transform_indices = @transform_2, window_bounds = array<i64: 1, 64>}, {transform_indices = @transform_3, window_bounds = array<i64: 16, 64>}]} {
    %c0_i32 = arith.constant 0 : i32
    %0 = arith.cmpi eq, %arg2, %c0_i32 : i32
    %1 = arith.extui %0 : i1 to i32
    %c0_i32_0 = arith.constant 0 : i32
    %2 = arith.cmpi ne, %1, %c0_i32_0 : i32
    scf.if %2 {
      %cst_10 = arith.constant 0.000000e+00 : f32
      %12 = vector.broadcast %cst_10 : f32 to vector<16x64xf32>
      %c0_11 = arith.constant 0 : index
      %c0_12 = arith.constant 0 : index
      %13 = vector.load %arg7[%c0_11, %c0_12] : memref<16x64xf32, #tpu.memory_space<vmem>>, vector<16x64xf32>
      tpu.vector_store %arg7[%c0_11, %c0_12], %12 {strides = array<i32>} : memref<16x64xf32, #tpu.memory_space<vmem>>, vector<16x64xf32>,
    } else {
    }
    %c0 = arith.constant 0 : index
    %c0_1 = arith.constant 0 : index
    %3 = vector.load %arg7[%c0, %c0_1] : memref<16x64xf32, #tpu.memory_space<vmem>>, vector<16x64xf32>
    %c0_2 = arith.constant 0 : index
    %c0_3 = arith.constant 0 : index
    %4 = vector.load %arg3[%c0_2, %c0_3] : memref<16x32xbf16, #tpu.memory_space<vmem>>, vector<16x32xbf16>
    %c0_4 = arith.constant 0 : index
    %c0_5 = arith.constant 0 : index
    %5 = vector.load %arg4[%c0_4, %c0_5] : memref<32x64xbf16, #tpu.memory_space<vmem>>, vector<32x64xbf16>
    %cst = arith.constant dense<0.000000e+00> : vector<16x64xf32>
    %6 = tpu.matmul %4, %5, %cst {dimension_numbers = #tpu.dot_dimension_numbers<[1], [0], [0], [1], [0, 0, 1, 1], [], []>} : vector<16x32xbf16>, vector<32x64xbf16>, vector<16x64xf32> -> vector<16x64xf32>
    %7 = arith.addf %3, %6 : vector<16x64xf32>
    %c0_6 = arith.constant 0 : index
    %c0_7 = arith.constant 0 : index
    %8 = vector.load %arg7[%c0_6, %c0_7] : memref<16x64xf32, #tpu.memory_space<vmem>>, vector<16x64xf32>
    tpu.vector_store %arg7[%c0_6, %c0_7], %7 {strides = array<i32>} : memref<16x64xf32, #tpu.memory_space<vmem>>, vector<16x64xf32>,
    %c0_i32_8 = arith.constant 0 : i32
    %9 = arith.cmpi eq, %arg2, %c0_i32_8 : i32
    %10 = arith.extui %9 : i1 to i32
    %c0_i32_9 = arith.constant 0 : i32
    %11 = arith.cmpi ne, %10, %c0_i32_9 : i32
    scf.if %11 {
      %c0_10 = arith.constant 0 : index
      %c0_11 = arith.constant 0 : index
      %12 = vector.load %arg7[%c0_10, %c0_11] : memref<16x64xf32, #tpu.memory_space<vmem>>, vector<16x64xf32>
      %c0_12 = arith.constant 0 : index
      %c0_13 = arith.constant 0 : index
      %13 = vector.load %arg5[%c0_12, %c0_13] : memref<1x64xf32, #tpu.memory_space<vmem>>, vector<1x64xf32>
      %14 = vector.broadcast %13 : vector<1x64xf32> to vector<16x64xf32>
      %15 = arith.addf %12, %14 : vector<16x64xf32>
      %16 = arith.truncf %15 : vector<16x64xf32> to vector<16x64xbf16>
      %c0_14 = arith.constant 0 : index
      %c0_15 = arith.constant 0 : index
      %17 = vector.load %arg6[%c0_14, %c0_15] : memref<16x64xbf16, #tpu.memory_space<vmem>>, vector<16x64xbf16>
      tpu.vector_store %arg6[%c0_14, %c0_15], %16 {strides = array<i32>} : memref<16x64xbf16, #tpu.memory_space<vmem>>, vector<16x64xbf16>,
    } else {
    }
    return
  }
  func.func @transform_0(%arg0: i32, %arg1: i32, %arg2: i32) -> (i32, i32) {
    %c0_i32 = arith.constant 0 : i32
    return %arg0, %arg2 : i32, i32
  }
  func.func @transform_1(%arg0: i32, %arg1: i32, %arg2: i32) -> (i32, i32) {
    %c0_i32 = arith.constant 0 : i32
    return %arg2, %arg1 : i32, i32
  }
  func.func @transform_2(%arg0: i32, %arg1: i32, %arg2: i32) -> (i32, i32) {
    %c0_i32 = arith.constant 0 : i32
    %c0_i32_0 = arith.constant 0 : i32
    return %c0_i32, %arg1 : i32, i32
  }
  func.func @transform_3(%arg0: i32, %arg1: i32, %arg2: i32) -> (i32, i32) {
    %c0_i32 = arith.constant 0 : i32
    return %arg0, %arg1 : i32, i32
  }
}

module attributes {stable_mosaic.version = 11 : i64} {
  func.func @_attn_kernel(%arg0: i32, %arg1: i32, %arg2: i32, %arg3: memref<1x16x32xbf16, #tpu.memory_space<vmem>>, %arg4: memref<1x16x32xbf16, #tpu.memory_space<vmem>>, %arg5: memref<1x16x32xbf16, #tpu.memory_space<vmem>>, %arg6: memref<1x16x32xbf16, #tpu.memory_space<vmem>>, %arg7: memref<4x16x1xf32, #tpu.memory_space<vmem>>, %arg8: memref<4x16x1xf32, #tpu.memory_space<vmem>>, %arg9: memref<4x16x8xf32, #tpu.memory_space<vmem>>) attributes {dimension_semantics = [#tpu.dimension_semantics<parallel>, #tpu.dimension_semantics<parallel>, #tpu.dimension_semantics<arbitrary>], iteration_bounds = array<i64: 2, 1, 1>, scalar_prefetch = 0 : i64, scratch_operands = 3 : i64, tpu.core_type = #tpu.core_type<tc>, window_params = [{transform_indices = @transform_0, window_bounds = array<i64: 1, 16, 32>}, {transform_indices = @transform_1, window_bounds = array<i64: 1, 16, 32>}, {transform_indices = @transform_2, window_bounds = array<i64: 1, 16, 32>}, {transform_indices = @transform_3, window_bounds = array<i64: 1, 16, 32>}]} {
    %c0_i32 = arith.constant 0 : i32
    %0 = arith.cmpi eq, %arg2, %c0_i32 : i32
    %1 = arith.extui %0 : i1 to i32
    %c0_i32_0 = arith.constant 0 : i32
    %2 = arith.cmpi ne, %1, %c0_i32_0 : i32
    scf.if %2 {
      %cst_99 = arith.constant 0xFF800000 : f32
      %170 = vector.broadcast %cst_99 : f32 to vector<4x16x1xf32>
      %c0_100 = arith.constant 0 : index
      %c0_101 = arith.constant 0 : index
      %c0_102 = arith.constant 0 : index
      %171 = vector.load %arg7[%c0_100, %c0_101, %c0_102] : memref<4x16x1xf32, #tpu.memory_space<vmem>>, vector<4x16x1xf32>
      tpu.vector_store %arg7[%c0_100, %c0_101, %c0_102], %170 {strides = array<i32>} : memref<4x16x1xf32, #tpu.memory_space<vmem>>, vector<4x16x1xf32>,
      %cst_103 = arith.constant 0.000000e+00 : f32
      %172 = vector.broadcast %cst_103 : f32 to vector<4x16x1xf32>
      %c0_104 = arith.constant 0 : index
      %c0_105 = arith.constant 0 : index
      %c0_106 = arith.constant 0 : index
      %173 = vector.load %arg8[%c0_104, %c0_105, %c0_106] : memref<4x16x1xf32, #tpu.memory_space<vmem>>, vector<4x16x1xf32>
      tpu.vector_store %arg8[%c0_104, %c0_105, %c0_106], %172 {strides = array<i32>} : memref<4x16x1xf32, #tpu.memory_space<vmem>>, vector<4x16x1xf32>,
      %cst_107 = arith.constant 0.000000e+00 : f32
      %174 = vector.broadcast %cst_107 : f32 to vector<4x16x8xf32>
      %c0_108 = arith.constant 0 : index
      %c0_109 = arith.constant 0 : index
      %c0_110 = arith.constant 0 : index
      %175 = vector.load %arg9[%c0_108, %c0_109, %c0_110] : memref<4x16x8xf32, #tpu.memory_space<vmem>>, vector<4x16x8xf32>
      tpu.vector_store %arg9[%c0_108, %c0_109, %c0_110], %174 {strides = array<i32>} : memref<4x16x8xf32, #tpu.memory_space<vmem>>, vector<4x16x8xf32>,
    } else {
    }
    %c0 = arith.constant 0 : index
    %c0_1 = arith.constant 0 : index
    %c0_2 = arith.constant 0 : index
    %3 = vector.load %arg3[%c0, %c0_1, %c0_2] : memref<1x16x32xbf16, #tpu.memory_space<vmem>>, vector<1x16x32xbf16>
    %4 = vector.shape_cast %3 : vector<1x16x32xbf16> to vector<16x32xbf16>
    %c0_3 = arith.constant 0 : index
    %c0_4 = arith.constant 0 : index
    %c0_5 = arith.constant 0 : index
    %5 = vector.load %arg4[%c0_3, %c0_4, %c0_5] : memref<1x16x32xbf16, #tpu.memory_space<vmem>>, vector<1x16x32xbf16>
    %6 = vector.shape_cast %5 : vector<1x16x32xbf16> to vector<16x32xbf16>
    %c0_6 = arith.constant 0 : index
    %c0_7 = arith.constant 0 : index
    %c0_8 = arith.constant 0 : index
    %7 = vector.load %arg5[%c0_6, %c0_7, %c0_8] : memref<1x16x32xbf16, #tpu.memory_space<vmem>>, vector<1x16x32xbf16>
    %8 = vector.shape_cast %7 : vector<1x16x32xbf16> to vector<16x32xbf16>
    %c16_i32 = arith.constant 16 : i32
    %9 = arith.muli %arg2, %c16_i32 : i32
    %10 = tpu.iota {dimensions = array<i32: 1>} : vector<16x16xi32>
    %11 = vector.broadcast %9 : i32 to vector<16x16xi32>
    %12 = arith.addi %11, %10 : vector<16x16xi32>
    %c8_i32 = arith.constant 8 : i32
    %13 = vector.broadcast %c8_i32 : i32 to vector<16x16xi32>
    %14 = arith.cmpi slt, %12, %13 : vector<16x16xi32>
    %15 = vector.extract_strided_slice %4 {offsets = [0, 0], sizes = [16, 8], strides = [1, 1]} : vector<16x32xbf16> to vector<16x8xbf16>
    %16 = vector.extract_strided_slice %6 {offsets = [0, 0], sizes = [16, 8], strides = [1, 1]} : vector<16x32xbf16> to vector<16x8xbf16>
    %17 = vector.extract_strided_slice %8 {offsets = [0, 0], sizes = [16, 8], strides = [1, 1]} : vector<16x32xbf16> to vector<16x8xbf16>
    %cst = arith.constant dense<0.000000e+00> : vector<16x16xf32>
    %18 = tpu.matmul %15, %16, %cst {dimension_numbers = #tpu.dot_dimension_numbers<[1], [1], [0], [0], [0, 0, 1, 0], [], []>} : vector<16x8xbf16>, vector<16x8xbf16>, vector<16x16xf32> -> vector<16x16xf32>
    %cst_9 = arith.constant -1.000000e+30 : f32
    %19 = vector.broadcast %cst_9 : f32 to vector<16x16xf32>
    %20 = arith.select %14, %18, %19 : vector<16x16xi1>, vector<16x16xf32>
    %c0_10 = arith.constant 0 : index
    %c0_11 = arith.constant 0 : index
    %c0_12 = arith.constant 0 : index
    %21 = vector.load %arg7[%c0_10, %c0_11, %c0_12] : memref<4x16x1xf32, #tpu.memory_space<vmem>>, vector<1x16x1xf32>
    %22 = vector.shape_cast %21 : vector<1x16x1xf32> to vector<16x1xf32>
    %c0_13 = arith.constant 0 : index
    %c0_14 = arith.constant 0 : index
    %c0_15 = arith.constant 0 : index
    %23 = vector.load %arg8[%c0_13, %c0_14, %c0_15] : memref<4x16x1xf32, #tpu.memory_space<vmem>>, vector<1x16x1xf32>
    %24 = vector.shape_cast %23 : vector<1x16x1xf32> to vector<16x1xf32>
    %c0_16 = arith.constant 0 : index
    %c0_17 = arith.constant 0 : index
    %c0_18 = arith.constant 0 : index
    %25 = vector.load %arg9[%c0_16, %c0_17, %c0_18] : memref<4x16x8xf32, #tpu.memory_space<vmem>>, vector<1x16x8xf32>
    %26 = vector.shape_cast %25 : vector<1x16x8xf32> to vector<16x8xf32>
    %cst_19 = arith.constant dense<0xFF800000> : vector<16xf32>
    %27 = vector.multi_reduction <maximumf>, %20, %cst_19 [1] : vector<16x16xf32> to vector<16xf32>
    %28 = vector.shape_cast %27 : vector<16xf32> to vector<16x1xf32>
    %29 = arith.maximumf %22, %28 : vector<16x1xf32>
    %30 = arith.subf %22, %29 : vector<16x1xf32>
    %31 = math.exp %30 : vector<16x1xf32>
    %32 = vector.broadcast %29 : vector<16x1xf32> to vector<16x16xf32>
    %33 = arith.subf %20, %32 : vector<16x16xf32>
    %34 = math.exp %33 : vector<16x16xf32>
    %35 = arith.truncf %34 : vector<16x16xf32> to vector<16x16xbf16>
    %cst_20 = arith.constant dense<0.000000e+00> : vector<16x8xf32>
    %36 = tpu.matmul %35, %17, %cst_20 {dimension_numbers = #tpu.dot_dimension_numbers<[1], [0], [0], [1], [0, 0, 1, 1], [], []>} : vector<16x16xbf16>, vector<16x8xbf16>, vector<16x8xf32> -> vector<16x8xf32>
    %c0_21 = arith.constant 0 : index
    %c0_22 = arith.constant 0 : index
    %c0_23 = arith.constant 0 : index
    %37 = vector.load %arg7[%c0_21, %c0_22, %c0_23] : memref<4x16x1xf32, #tpu.memory_space<vmem>>, vector<1x16x1xf32>
    %38 = vector.shape_cast %37 : vector<1x16x1xf32> to vector<16x1xf32>
    %39 = vector.shape_cast %29 : vector<16x1xf32> to vector<1x16x1xf32>
    tpu.vector_store %arg7[%c0_21, %c0_22, %c0_23], %39 {strides = array<i32>} : memref<4x16x1xf32, #tpu.memory_space<vmem>>, vector<1x16x1xf32>,
    %40 = arith.mulf %31, %24 : vector<16x1xf32>
    %cst_24 = arith.constant dense<0.000000e+00> : vector<16xf32>
    %41 = vector.multi_reduction <add>, %34, %cst_24 [1] : vector<16x16xf32> to vector<16xf32>
    %42 = vector.shape_cast %41 : vector<16xf32> to vector<16x1xf32>
    %43 = arith.addf %40, %42 : vector<16x1xf32>
    %c0_25 = arith.constant 0 : index
    %c0_26 = arith.constant 0 : index
    %c0_27 = arith.constant 0 : index
    %44 = vector.load %arg8[%c0_25, %c0_26, %c0_27] : memref<4x16x1xf32, #tpu.memory_space<vmem>>, vector<1x16x1xf32>
    %45 = vector.shape_cast %44 : vector<1x16x1xf32> to vector<16x1xf32>
    %46 = vector.shape_cast %43 : vector<16x1xf32> to vector<1x16x1xf32>
    tpu.vector_store %arg8[%c0_25, %c0_26, %c0_27], %46 {strides = array<i32>} : memref<4x16x1xf32, #tpu.memory_space<vmem>>, vector<1x16x1xf32>,
    %47 = vector.broadcast %31 : vector<16x1xf32> to vector<16x8xf32>
    %48 = arith.mulf %47, %26 : vector<16x8xf32>
    %49 = arith.addf %48, %36 : vector<16x8xf32>
    %c0_28 = arith.constant 0 : index
    %c0_29 = arith.constant 0 : index
    %c0_30 = arith.constant 0 : index
    %50 = vector.load %arg9[%c0_28, %c0_29, %c0_30] : memref<4x16x8xf32, #tpu.memory_space<vmem>>, vector<1x16x8xf32>
    %51 = vector.shape_cast %50 : vector<1x16x8xf32> to vector<16x8xf32>
    %52 = vector.shape_cast %49 : vector<16x8xf32> to vector<1x16x8xf32>
    tpu.vector_store %arg9[%c0_28, %c0_29, %c0_30], %52 {strides = array<i32>} : memref<4x16x8xf32, #tpu.memory_space<vmem>>, vector<1x16x8xf32>,
    %53 = vector.extract_strided_slice %4 {offsets = [0, 8], sizes = [16, 8], strides = [1, 1]} : vector<16x32xbf16> to vector<16x8xbf16>
    %54 = vector.extract_strided_slice %6 {offsets = [0, 8], sizes = [16, 8], strides = [1, 1]} : vector<16x32xbf16> to vector<16x8xbf16>
    %55 = vector.extract_strided_slice %8 {offsets = [0, 8], sizes = [16, 8], strides = [1, 1]} : vector<16x32xbf16> to vector<16x8xbf16>
    %cst_31 = arith.constant dense<0.000000e+00> : vector<16x16xf32>
    %56 = tpu.matmul %53, %54, %cst_31 {dimension_numbers = #tpu.dot_dimension_numbers<[1], [1], [0], [0], [0, 0, 1, 0], [], []>} : vector<16x8xbf16>, vector<16x8xbf16>, vector<16x16xf32> -> vector<16x16xf32>
    %cst_32 = arith.constant -1.000000e+30 : f32
    %57 = vector.broadcast %cst_32 : f32 to vector<16x16xf32>
    %58 = arith.select %14, %56, %57 : vector<16x16xi1>, vector<16x16xf32>
    %c1 = arith.constant 1 : index
    %c0_33 = arith.constant 0 : index
    %c0_34 = arith.constant 0 : index
    %59 = vector.load %arg7[%c1, %c0_33, %c0_34] : memref<4x16x1xf32, #tpu.memory_space<vmem>>, vector<1x16x1xf32>
    %60 = vector.shape_cast %59 : vector<1x16x1xf32> to vector<16x1xf32>
    %c1_35 = arith.constant 1 : index
    %c0_36 = arith.constant 0 : index
    %c0_37 = arith.constant 0 : index
    %61 = vector.load %arg8[%c1_35, %c0_36, %c0_37] : memref<4x16x1xf32, #tpu.memory_space<vmem>>, vector<1x16x1xf32>
    %62 = vector.shape_cast %61 : vector<1x16x1xf32> to vector<16x1xf32>
    %c1_38 = arith.constant 1 : index
    %c0_39 = arith.constant 0 : index
    %c0_40 = arith.constant 0 : index
    %63 = vector.load %arg9[%c1_38, %c0_39, %c0_40] : memref<4x16x8xf32, #tpu.memory_space<vmem>>, vector<1x16x8xf32>
    %64 = vector.shape_cast %63 : vector<1x16x8xf32> to vector<16x8xf32>
    %cst_41 = arith.constant dense<0xFF800000> : vector<16xf32>
    %65 = vector.multi_reduction <maximumf>, %58, %cst_41 [1] : vector<16x16xf32> to vector<16xf32>
    %66 = vector.shape_cast %65 : vector<16xf32> to vector<16x1xf32>
    %67 = arith.maximumf %60, %66 : vector<16x1xf32>
    %68 = arith.subf %60, %67 : vector<16x1xf32>
    %69 = math.exp %68 : vector<16x1xf32>
    %70 = vector.broadcast %67 : vector<16x1xf32> to vector<16x16xf32>
    %71 = arith.subf %58, %70 : vector<16x16xf32>
    %72 = math.exp %71 : vector<16x16xf32>
    %73 = arith.truncf %72 : vector<16x16xf32> to vector<16x16xbf16>
    %cst_42 = arith.constant dense<0.000000e+00> : vector<16x8xf32>
    %74 = tpu.matmul %73, %55, %cst_42 {dimension_numbers = #tpu.dot_dimension_numbers<[1], [0], [0], [1], [0, 0, 1, 1], [], []>} : vector<16x16xbf16>, vector<16x8xbf16>, vector<16x8xf32> -> vector<16x8xf32>
    %c1_43 = arith.constant 1 : index
    %c0_44 = arith.constant 0 : index
    %c0_45 = arith.constant 0 : index
    %75 = vector.load %arg7[%c1_43, %c0_44, %c0_45] : memref<4x16x1xf32, #tpu.memory_space<vmem>>, vector<1x16x1xf32>
    %76 = vector.shape_cast %75 : vector<1x16x1xf32> to vector<16x1xf32>
    %77 = vector.shape_cast %67 : vector<16x1xf32> to vector<1x16x1xf32>
    tpu.vector_store %arg7[%c1_43, %c0_44, %c0_45], %77 {strides = array<i32>} : memref<4x16x1xf32, #tpu.memory_space<vmem>>, vector<1x16x1xf32>,
    %78 = arith.mulf %69, %62 : vector<16x1xf32>
    %cst_46 = arith.constant dense<0.000000e+00> : vector<16xf32>
    %79 = vector.multi_reduction <add>, %72, %cst_46 [1] : vector<16x16xf32> to vector<16xf32>
    %80 = vector.shape_cast %79 : vector<16xf32> to vector<16x1xf32>
    %81 = arith.addf %78, %80 : vector<16x1xf32>
    %c1_47 = arith.constant 1 : index
    %c0_48 = arith.constant 0 : index
    %c0_49 = arith.constant 0 : index
    %82 = vector.load %arg8[%c1_47, %c0_48, %c0_49] : memref<4x16x1xf32, #tpu.memory_space<vmem>>, vector<1x16x1xf32>
    %83 = vector.shape_cast %82 : vector<1x16x1xf32> to vector<16x1xf32>
    %84 = vector.shape_cast %81 : vector<16x1xf32> to vector<1x16x1xf32>
    tpu.vector_store %arg8[%c1_47, %c0_48, %c0_49], %84 {strides = array<i32>} : memref<4x16x1xf32, #tpu.memory_space<vmem>>, vector<1x16x1xf32>,
    %85 = vector.broadcast %69 : vector<16x1xf32> to vector<16x8xf32>
    %86 = arith.mulf %85, %64 : vector<16x8xf32>
    %87 = arith.addf %86, %74 : vector<16x8xf32>
    %c1_50 = arith.constant 1 : index
    %c0_51 = arith.constant 0 : index
    %c0_52 = arith.constant 0 : index
    %88 = vector.load %arg9[%c1_50, %c0_51, %c0_52] : memref<4x16x8xf32, #tpu.memory_space<vmem>>, vector<1x16x8xf32>
    %89 = vector.shape_cast %88 : vector<1x16x8xf32> to vector<16x8xf32>
    %90 = vector.shape_cast %87 : vector<16x8xf32> to vector<1x16x8xf32>
    tpu.vector_store %arg9[%c1_50, %c0_51, %c0_52], %90 {strides = array<i32>} : memref<4x16x8xf32, #tpu.memory_space<vmem>>, vector<1x16x8xf32>,
    %91 = vector.extract_strided_slice %4 {offsets = [0, 16], sizes = [16, 8], strides = [1, 1]} : vector<16x32xbf16> to vector<16x8xbf16>
    %92 = vector.extract_strided_slice %6 {offsets = [0, 16], sizes = [16, 8], strides = [1, 1]} : vector<16x32xbf16> to vector<16x8xbf16>
    %93 = vector.extract_strided_slice %8 {offsets = [0, 16], sizes = [16, 8], strides = [1, 1]} : vector<16x32xbf16> to vector<16x8xbf16>
    %cst_53 = arith.constant dense<0.000000e+00> : vector<16x16xf32>
    %94 = tpu.matmul %91, %92, %cst_53 {dimension_numbers = #tpu.dot_dimension_numbers<[1], [1], [0], [0], [0, 0, 1, 0], [], []>} : vector<16x8xbf16>, vector<16x8xbf16>, vector<16x16xf32> -> vector<16x16xf32>
    %cst_54 = arith.constant -1.000000e+30 : f32
    %95 = vector.broadcast %cst_54 : f32 to vector<16x16xf32>
    %96 = arith.select %14, %94, %95 : vector<16x16xi1>, vector<16x16xf32>
    %c2 = arith.constant 2 : index
    %c0_55 = arith.constant 0 : index
    %c0_56 = arith.constant 0 : index
    %97 = vector.load %arg7[%c2, %c0_55, %c0_56] : memref<4x16x1xf32, #tpu.memory_space<vmem>>, vector<1x16x1xf32>
    %98 = vector.shape_cast %97 : vector<1x16x1xf32> to vector<16x1xf32>
    %c2_57 = arith.constant 2 : index
    %c0_58 = arith.constant 0 : index
    %c0_59 = arith.constant 0 : index
    %99 = vector.load %arg8[%c2_57, %c0_58, %c0_59] : memref<4x16x1xf32, #tpu.memory_space<vmem>>, vector<1x16x1xf32>
    %100 = vector.shape_cast %99 : vector<1x16x1xf32> to vector<16x1xf32>
    %c2_60 = arith.constant 2 : index
    %c0_61 = arith.constant 0 : index
    %c0_62 = arith.constant 0 : index
    %101 = vector.load %arg9[%c2_60, %c0_61, %c0_62] : memref<4x16x8xf32, #tpu.memory_space<vmem>>, vector<1x16x8xf32>
    %102 = vector.shape_cast %101 : vector<1x16x8xf32> to vector<16x8xf32>
    %cst_63 = arith.constant dense<0xFF800000> : vector<16xf32>
    %103 = vector.multi_reduction <maximumf>, %96, %cst_63 [1] : vector<16x16xf32> to vector<16xf32>
    %104 = vector.shape_cast %103 : vector<16xf32> to vector<16x1xf32>
    %105 = arith.maximumf %98, %104 : vector<16x1xf32>
    %106 = arith.subf %98, %105 : vector<16x1xf32>
    %107 = math.exp %106 : vector<16x1xf32>
    %108 = vector.broadcast %105 : vector<16x1xf32> to vector<16x16xf32>
    %109 = arith.subf %96, %108 : vector<16x16xf32>
    %110 = math.exp %109 : vector<16x16xf32>
    %111 = arith.truncf %110 : vector<16x16xf32> to vector<16x16xbf16>
    %cst_64 = arith.constant dense<0.000000e+00> : vector<16x8xf32>
    %112 = tpu.matmul %111, %93, %cst_64 {dimension_numbers = #tpu.dot_dimension_numbers<[1], [0], [0], [1], [0, 0, 1, 1], [], []>} : vector<16x16xbf16>, vector<16x8xbf16>, vector<16x8xf32> -> vector<16x8xf32>
    %c2_65 = arith.constant 2 : index
    %c0_66 = arith.constant 0 : index
    %c0_67 = arith.constant 0 : index
    %113 = vector.load %arg7[%c2_65, %c0_66, %c0_67] : memref<4x16x1xf32, #tpu.memory_space<vmem>>, vector<1x16x1xf32>
    %114 = vector.shape_cast %113 : vector<1x16x1xf32> to vector<16x1xf32>
    %115 = vector.shape_cast %105 : vector<16x1xf32> to vector<1x16x1xf32>
    tpu.vector_store %arg7[%c2_65, %c0_66, %c0_67], %115 {strides = array<i32>} : memref<4x16x1xf32, #tpu.memory_space<vmem>>, vector<1x16x1xf32>,
    %116 = arith.mulf %107, %100 : vector<16x1xf32>
    %cst_68 = arith.constant dense<0.000000e+00> : vector<16xf32>
    %117 = vector.multi_reduction <add>, %110, %cst_68 [1] : vector<16x16xf32> to vector<16xf32>
    %118 = vector.shape_cast %117 : vector<16xf32> to vector<16x1xf32>
    %119 = arith.addf %116, %118 : vector<16x1xf32>
    %c2_69 = arith.constant 2 : index
    %c0_70 = arith.constant 0 : index
    %c0_71 = arith.constant 0 : index
    %120 = vector.load %arg8[%c2_69, %c0_70, %c0_71] : memref<4x16x1xf32, #tpu.memory_space<vmem>>, vector<1x16x1xf32>
    %121 = vector.shape_cast %120 : vector<1x16x1xf32> to vector<16x1xf32>
    %122 = vector.shape_cast %119 : vector<16x1xf32> to vector<1x16x1xf32>
    tpu.vector_store %arg8[%c2_69, %c0_70, %c0_71], %122 {strides = array<i32>} : memref<4x16x1xf32, #tpu.memory_space<vmem>>, vector<1x16x1xf32>,
    %123 = vector.broadcast %107 : vector<16x1xf32> to vector<16x8xf32>
    %124 = arith.mulf %123, %102 : vector<16x8xf32>
    %125 = arith.addf %124, %112 : vector<16x8xf32>
    %c2_72 = arith.constant 2 : index
    %c0_73 = arith.constant 0 : index
    %c0_74 = arith.constant 0 : index
    %126 = vector.load %arg9[%c2_72, %c0_73, %c0_74] : memref<4x16x8xf32, #tpu.memory_space<vmem>>, vector<1x16x8xf32>
    %127 = vector.shape_cast %126 : vector<1x16x8xf32> to vector<16x8xf32>
    %128 = vector.shape_cast %125 : vector<16x8xf32> to vector<1x16x8xf32>
    tpu.vector_store %arg9[%c2_72, %c0_73, %c0_74], %128 {strides = array<i32>} : memref<4x16x8xf32, #tpu.memory_space<vmem>>, vector<1x16x8xf32>,
    %129 = vector.extract_strided_slice %4 {offsets = [0, 24], sizes = [16, 8], strides = [1, 1]} : vector<16x32xbf16> to vector<16x8xbf16>
    %130 = vector.extract_strided_slice %6 {offsets = [0, 24], sizes = [16, 8], strides = [1, 1]} : vector<16x32xbf16> to vector<16x8xbf16>
    %131 = vector.extract_strided_slice %8 {offsets = [0, 24], sizes = [16, 8], strides = [1, 1]} : vector<16x32xbf16> to vector<16x8xbf16>
    %cst_75 = arith.constant dense<0.000000e+00> : vector<16x16xf32>
    %132 = tpu.matmul %129, %130, %cst_75 {dimension_numbers = #tpu.dot_dimension_numbers<[1], [1], [0], [0], [0, 0, 1, 0], [], []>} : vector<16x8xbf16>, vector<16x8xbf16>, vector<16x16xf32> -> vector<16x16xf32>
    %cst_76 = arith.constant -1.000000e+30 : f32
    %133 = vector.broadcast %cst_76 : f32 to vector<16x16xf32>
    %134 = arith.select %14, %132, %133 : vector<16x16xi1>, vector<16x16xf32>
    %c3 = arith.constant 3 : index
    %c0_77 = arith.constant 0 : index
    %c0_78 = arith.constant 0 : index
    %135 = vector.load %arg7[%c3, %c0_77, %c0_78] : memref<4x16x1xf32, #tpu.memory_space<vmem>>, vector<1x16x1xf32>
    %136 = vector.shape_cast %135 : vector<1x16x1xf32> to vector<16x1xf32>
    %c3_79 = arith.constant 3 : index
    %c0_80 = arith.constant 0 : index
    %c0_81 = arith.constant 0 : index
    %137 = vector.load %arg8[%c3_79, %c0_80, %c0_81] : memref<4x16x1xf32, #tpu.memory_space<vmem>>, vector<1x16x1xf32>
    %138 = vector.shape_cast %137 : vector<1x16x1xf32> to vector<16x1xf32>
    %c3_82 = arith.constant 3 : index
    %c0_83 = arith.constant 0 : index
    %c0_84 = arith.constant 0 : index
    %139 = vector.load %arg9[%c3_82, %c0_83, %c0_84] : memref<4x16x8xf32, #tpu.memory_space<vmem>>, vector<1x16x8xf32>
    %140 = vector.shape_cast %139 : vector<1x16x8xf32> to vector<16x8xf32>
    %cst_85 = arith.constant dense<0xFF800000> : vector<16xf32>
    %141 = vector.multi_reduction <maximumf>, %134, %cst_85 [1] : vector<16x16xf32> to vector<16xf32>
    %142 = vector.shape_cast %141 : vector<16xf32> to vector<16x1xf32>
    %143 = arith.maximumf %136, %142 : vector<16x1xf32>
    %144 = arith.subf %136, %143 : vector<16x1xf32>
    %145 = math.exp %144 : vector<16x1xf32>
    %146 = vector.broadcast %143 : vector<16x1xf32> to vector<16x16xf32>
    %147 = arith.subf %134, %146 : vector<16x16xf32>
    %148 = math.exp %147 : vector<16x16xf32>
    %149 = arith.truncf %148 : vector<16x16xf32> to vector<16x16xbf16>
    %cst_86 = arith.constant dense<0.000000e+00> : vector<16x8xf32>
    %150 = tpu.matmul %149, %131, %cst_86 {dimension_numbers = #tpu.dot_dimension_numbers<[1], [0], [0], [1], [0, 0, 1, 1], [], []>} : vector<16x16xbf16>, vector<16x8xbf16>, vector<16x8xf32> -> vector<16x8xf32>
    %c3_87 = arith.constant 3 : index
    %c0_88 = arith.constant 0 : index
    %c0_89 = arith.constant 0 : index
    %151 = vector.load %arg7[%c3_87, %c0_88, %c0_89] : memref<4x16x1xf32, #tpu.memory_space<vmem>>, vector<1x16x1xf32>
    %152 = vector.shape_cast %151 : vector<1x16x1xf32> to vector<16x1xf32>
    %153 = vector.shape_cast %143 : vector<16x1xf32> to vector<1x16x1xf32>
    tpu.vector_store %arg7[%c3_87, %c0_88, %c0_89], %153 {strides = array<i32>} : memref<4x16x1xf32, #tpu.memory_space<vmem>>, vector<1x16x1xf32>,
    %154 = arith.mulf %145, %138 : vector<16x1xf32>
    %cst_90 = arith.constant dense<0.000000e+00> : vector<16xf32>
    %155 = vector.multi_reduction <add>, %148, %cst_90 [1] : vector<16x16xf32> to vector<16xf32>
    %156 = vector.shape_cast %155 : vector<16xf32> to vector<16x1xf32>
    %157 = arith.addf %154, %156 : vector<16x1xf32>
    %c3_91 = arith.constant 3 : index
    %c0_92 = arith.constant 0 : index
    %c0_93 = arith.constant 0 : index
    %158 = vector.load %arg8[%c3_91, %c0_92, %c0_93] : memref<4x16x1xf32, #tpu.memory_space<vmem>>, vector<1x16x1xf32>
    %159 = vector.shape_cast %158 : vector<1x16x1xf32> to vector<16x1xf32>
    %160 = vector.shape_cast %157 : vector<16x1xf32> to vector<1x16x1xf32>
    tpu.vector_store %arg8[%c3_91, %c0_92, %c0_93], %160 {strides = array<i32>} : memref<4x16x1xf32, #tpu.memory_space<vmem>>, vector<1x16x1xf32>,
    %161 = vector.broadcast %145 : vector<16x1xf32> to vector<16x8xf32>
    %162 = arith.mulf %161, %140 : vector<16x8xf32>
    %163 = arith.addf %162, %150 : vector<16x8xf32>
    %c3_94 = arith.constant 3 : index
    %c0_95 = arith.constant 0 : index
    %c0_96 = arith.constant 0 : index
    %164 = vector.load %arg9[%c3_94, %c0_95, %c0_96] : memref<4x16x8xf32, #tpu.memory_space<vmem>>, vector<1x16x8xf32>
    %165 = vector.shape_cast %164 : vector<1x16x8xf32> to vector<16x8xf32>
    %166 = vector.shape_cast %163 : vector<16x8xf32> to vector<1x16x8xf32>
    tpu.vector_store %arg9[%c3_94, %c0_95, %c0_96], %166 {strides = array<i32>} : memref<4x16x8xf32, #tpu.memory_space<vmem>>, vector<1x16x8xf32>,
    %c0_i32_97 = arith.constant 0 : i32
    %167 = arith.cmpi eq, %arg2, %c0_i32_97 : i32
    %168 = arith.extui %167 : i1 to i32
    %c0_i32_98 = arith.constant 0 : i32
    %169 = arith.cmpi ne, %168, %c0_i32_98 : i32
    scf.if %169 {
      %c0_99 = arith.constant 0 : index
      %c0_100 = arith.constant 0 : index
      %c0_101 = arith.constant 0 : index
      %170 = vector.load %arg8[%c0_99, %c0_100, %c0_101] : memref<4x16x1xf32, #tpu.memory_space<vmem>>, vector<1x16x1xf32>
      %171 = vector.shape_cast %170 : vector<1x16x1xf32> to vector<16x1xf32>
      %172 = tpu.reciprocal %171 {approx = true} : vector<16x1xf32> -> vector<16x1xf32>
      %c0_102 = arith.constant 0 : index
      %c0_103 = arith.constant 0 : index
      %c0_104 = arith.constant 0 : index
      %173 = vector.load %arg9[%c0_102, %c0_103, %c0_104] : memref<4x16x8xf32, #tpu.memory_space<vmem>>, vector<1x16x8xf32>
      %174 = vector.shape_cast %173 : vector<1x16x8xf32> to vector<16x8xf32>
      %175 = vector.broadcast %172 : vector<16x1xf32> to vector<16x8xf32>
      %176 = arith.mulf %174, %175 : vector<16x8xf32>
      %c1_105 = arith.constant 1 : index
      %c0_106 = arith.constant 0 : index
      %c0_107 = arith.constant 0 : index
      %177 = vector.load %arg8[%c1_105, %c0_106, %c0_107] : memref<4x16x1xf32, #tpu.memory_space<vmem>>, vector<1x16x1xf32>
      %178 = vector.shape_cast %177 : vector<1x16x1xf32> to vector<16x1xf32>
      %179 = tpu.reciprocal %178 {approx = true} : vector<16x1xf32> -> vector<16x1xf32>
      %c1_108 = arith.constant 1 : index
      %c0_109 = arith.constant 0 : index
      %c0_110 = arith.constant 0 : index
      %180 = vector.load %arg9[%c1_108, %c0_109, %c0_110] : memref<4x16x8xf32, #tpu.memory_space<vmem>>, vector<1x16x8xf32>
      %181 = vector.shape_cast %180 : vector<1x16x8xf32> to vector<16x8xf32>
      %182 = vector.broadcast %179 : vector<16x1xf32> to vector<16x8xf32>
      %183 = arith.mulf %181, %182 : vector<16x8xf32>
      %c2_111 = arith.constant 2 : index
      %c0_112 = arith.constant 0 : index
      %c0_113 = arith.constant 0 : index
      %184 = vector.load %arg8[%c2_111, %c0_112, %c0_113] : memref<4x16x1xf32, #tpu.memory_space<vmem>>, vector<1x16x1xf32>
      %185 = vector.shape_cast %184 : vector<1x16x1xf32> to vector<16x1xf32>
      %186 = tpu.reciprocal %185 {approx = true} : vector<16x1xf32> -> vector<16x1xf32>
      %c2_114 = arith.constant 2 : index
      %c0_115 = arith.constant 0 : index
      %c0_116 = arith.constant 0 : index
      %187 = vector.load %arg9[%c2_114, %c0_115, %c0_116] : memref<4x16x8xf32, #tpu.memory_space<vmem>>, vector<1x16x8xf32>
      %188 = vector.shape_cast %187 : vector<1x16x8xf32> to vector<16x8xf32>
      %189 = vector.broadcast %186 : vector<16x1xf32> to vector<16x8xf32>
      %190 = arith.mulf %188, %189 : vector<16x8xf32>
      %c3_117 = arith.constant 3 : index
      %c0_118 = arith.constant 0 : index
      %c0_119 = arith.constant 0 : index
      %191 = vector.load %arg8[%c3_117, %c0_118, %c0_119] : memref<4x16x1xf32, #tpu.memory_space<vmem>>, vector<1x16x1xf32>
      %192 = vector.shape_cast %191 : vector<1x16x1xf32> to vector<16x1xf32>
      %193 = tpu.reciprocal %192 {approx = true} : vector<16x1xf32> -> vector<16x1xf32>
      %c3_120 = arith.constant 3 : index
      %c0_121 = arith.constant 0 : index
      %c0_122 = arith.constant 0 : index
      %194 = vector.load %arg9[%c3_120, %c0_121, %c0_122] : memref<4x16x8xf32, #tpu.memory_space<vmem>>, vector<1x16x8xf32>
      %195 = vector.shape_cast %194 : vector<1x16x8xf32> to vector<16x8xf32>
      %196 = vector.broadcast %193 : vector<16x1xf32> to vector<16x8xf32>
      %197 = arith.mulf %195, %196 : vector<16x8xf32>
      %198 = tpu.concatenate %176, %183, %190, %197 in 1 : vector<16x8xf32>, vector<16x8xf32>, vector<16x8xf32>, vector<16x8xf32> -> vector<16x32xf32>
      %199 = arith.truncf %198 : vector<16x32xf32> to vector<16x32xbf16>
      %c0_123 = arith.constant 0 : index
      %c0_124 = arith.constant 0 : index
      %c0_125 = arith.constant 0 : index
      %200 = vector.load %arg6[%c0_123, %c0_124, %c0_125] : memref<1x16x32xbf16, #tpu.memory_space<vmem>>, vector<1x16x32xbf16>
      %201 = vector.shape_cast %200 : vector<1x16x32xbf16> to vector<16x32xbf16>
      %202 = vector.shape_cast %199 : vector<16x32xbf16> to vector<1x16x32xbf16>
      tpu.vector_store %arg6[%c0_123, %c0_124, %c0_125], %202 {strides = array<i32>} : memref<1x16x32xbf16, #tpu.memory_space<vmem>>, vector<1x16x32xbf16>,
    } else {
    }
    return
  }
  func.func @transform_0(%arg0: i32, %arg1: i32, %arg2: i32) -> (i32, i32, i32) {
    %c0_i32 = arith.constant 0 : i32
    %c0_i32_0 = arith.constant 0 : i32
    return %arg0, %arg1, %c0_i32 : i32, i32, i32
  }
  func.func @transform_1(%arg0: i32, %arg1: i32, %arg2: i32) -> (i32, i32, i32) {
    %c0_i32 = arith.constant 0 : i32
    %c0_i32_0 = arith.constant 0 : i32
    return %arg0, %arg2, %c0_i32 : i32, i32, i32
  }
  func.func @transform_2(%arg0: i32, %arg1: i32, %arg2: i32) -> (i32, i32, i32) {
    %c0_i32 = arith.constant 0 : i32
    %c0_i32_0 = arith.constant 0 : i32
    return %arg0, %arg2, %c0_i32 : i32, i32, i32
  }
  func.func @transform_3(%arg0: i32, %arg1: i32, %arg2: i32) -> (i32, i32, i32) {
    %c0_i32 = arith.constant 0 : i32
    %c0_i32_0 = arith.constant 0 : i32
    return %arg0, %arg1, %c0_i32 : i32, i32, i32
  }
}

module attributes {stable_mosaic.version = 11 : i64} {
  func.func @_linear_kernel(%arg0: i32, %arg1: i32, %arg2: i32, %arg3: memref<16x32xbf16, #tpu.memory_space<vmem>>, %arg4: memref<32x32xbf16, #tpu.memory_space<vmem>>, %arg5: memref<1x32xf32, #tpu.memory_space<vmem>>, %arg6: memref<16x32xf32, #tpu.memory_space<vmem>>, %arg7: memref<16x32xf32, #tpu.memory_space<vmem>>) attributes {dimension_semantics = [#tpu.dimension_semantics<parallel>, #tpu.dimension_semantics<parallel>, #tpu.dimension_semantics<arbitrary>], iteration_bounds = array<i64: 1, 1, 1>, scalar_prefetch = 0 : i64, scratch_operands = 1 : i64, tpu.core_type = #tpu.core_type<tc>, window_params = [{transform_indices = @transform_0, window_bounds = array<i64: 16, 32>}, {transform_indices = @transform_1, window_bounds = array<i64: 32, 32>}, {transform_indices = @transform_2, window_bounds = array<i64: 1, 32>}, {transform_indices = @transform_3, window_bounds = array<i64: 16, 32>}]} {
    %c0_i32 = arith.constant 0 : i32
    %0 = arith.cmpi eq, %arg2, %c0_i32 : i32
    %1 = arith.extui %0 : i1 to i32
    %c0_i32_0 = arith.constant 0 : i32
    %2 = arith.cmpi ne, %1, %c0_i32_0 : i32
    scf.if %2 {
      %cst_10 = arith.constant 0.000000e+00 : f32
      %12 = vector.broadcast %cst_10 : f32 to vector<16x32xf32>
      %c0_11 = arith.constant 0 : index
      %c0_12 = arith.constant 0 : index
      %13 = vector.load %arg7[%c0_11, %c0_12] : memref<16x32xf32, #tpu.memory_space<vmem>>, vector<16x32xf32>
      tpu.vector_store %arg7[%c0_11, %c0_12], %12 {strides = array<i32>} : memref<16x32xf32, #tpu.memory_space<vmem>>, vector<16x32xf32>,
    } else {
    }
    %c0 = arith.constant 0 : index
    %c0_1 = arith.constant 0 : index
    %3 = vector.load %arg7[%c0, %c0_1] : memref<16x32xf32, #tpu.memory_space<vmem>>, vector<16x32xf32>
    %c0_2 = arith.constant 0 : index
    %c0_3 = arith.constant 0 : index
    %4 = vector.load %arg3[%c0_2, %c0_3] : memref<16x32xbf16, #tpu.memory_space<vmem>>, vector<16x32xbf16>
    %c0_4 = arith.constant 0 : index
    %c0_5 = arith.constant 0 : index
    %5 = vector.load %arg4[%c0_4, %c0_5] : memref<32x32xbf16, #tpu.memory_space<vmem>>, vector<32x32xbf16>
    %cst = arith.constant dense<0.000000e+00> : vector<16x32xf32>
    %6 = tpu.matmul %4, %5, %cst {dimension_numbers = #tpu.dot_dimension_numbers<[1], [0], [0], [1], [0, 0, 1, 1], [], []>} : vector<16x32xbf16>, vector<32x32xbf16>, vector<16x32xf32> -> vector<16x32xf32>
    %7 = arith.addf %3, %6 : vector<16x32xf32>
    %c0_6 = arith.constant 0 : index
    %c0_7 = arith.constant 0 : index
    %8 = vector.load %arg7[%c0_6, %c0_7] : memref<16x32xf32, #tpu.memory_space<vmem>>, vector<16x32xf32>
    tpu.vector_store %arg7[%c0_6, %c0_7], %7 {strides = array<i32>} : memref<16x32xf32, #tpu.memory_space<vmem>>, vector<16x32xf32>,
    %c0_i32_8 = arith.constant 0 : i32
    %9 = arith.cmpi eq, %arg2, %c0_i32_8 : i32
    %10 = arith.extui %9 : i1 to i32
    %c0_i32_9 = arith.constant 0 : i32
    %11 = arith.cmpi ne, %10, %c0_i32_9 : i32
    scf.if %11 {
      %c0_10 = arith.constant 0 : index
      %c0_11 = arith.constant 0 : index
      %12 = vector.load %arg7[%c0_10, %c0_11] : memref<16x32xf32, #tpu.memory_space<vmem>>, vector<16x32xf32>
      %c0_12 = arith.constant 0 : index
      %c0_13 = arith.constant 0 : index
      %13 = vector.load %arg5[%c0_12, %c0_13] : memref<1x32xf32, #tpu.memory_space<vmem>>, vector<1x32xf32>
      %14 = vector.broadcast %13 : vector<1x32xf32> to vector<16x32xf32>
      %15 = arith.addf %12, %14 : vector<16x32xf32>
      %c0_14 = arith.constant 0 : index
      %c0_15 = arith.constant 0 : index
      %16 = vector.load %arg6[%c0_14, %c0_15] : memref<16x32xf32, #tpu.memory_space<vmem>>, vector<16x32xf32>
      tpu.vector_store %arg6[%c0_14, %c0_15], %15 {strides = array<i32>} : memref<16x32xf32, #tpu.memory_space<vmem>>, vector<16x32xf32>,
    } else {
    }
    return
  }
  func.func @transform_0(%arg0: i32, %arg1: i32, %arg2: i32) -> (i32, i32) {
    %c0_i32 = arith.constant 0 : i32
    return %arg0, %arg2 : i32, i32
  }
  func.func @transform_1(%arg0: i32, %arg1: i32, %arg2: i32) -> (i32, i32) {
    %c0_i32 = arith.constant 0 : i32
    return %arg2, %arg1 : i32, i32
  }
  func.func @transform_2(%arg0: i32, %arg1: i32, %arg2: i32) -> (i32, i32) {
    %c0_i32 = arith.constant 0 : i32
    %c0_i32_0 = arith.constant 0 : i32
    return %c0_i32, %arg1 : i32, i32
  }
  func.func @transform_3(%arg0: i32, %arg1: i32, %arg2: i32) -> (i32, i32) {
    %c0_i32 = arith.constant 0 : i32
    return %arg0, %arg1 : i32, i32
  }
}

</mosaic_0001>

<llo_original>
// kernel: mha_forward.4
$region0: #{mha_forward.4}
  #allocation0 [shape = 'u32[]', space=smem, size = 0x4, offset = 0x4, fixed_abs, tag = 'smem constant byte address 0x4 - core index']
  #allocation1 [shape = 'u32[144,128]{1,0:T(1,128)}', space=vmem, size = 0x12000, scoped, tag = 'internal scratch']
  #allocation2 [shape = 'f32[16,32]{1,0:T(8,128)}', space=vmem, size = 0x2000, scoped, tag = 'scratch operand']
  %s0 = inlined_call_operand.vmem [shape: bf16[16,32], index: 0, kind: input, shape index: {}]
  %s1 = inlined_call_operand.vmem [shape: bf16[32,32], index: 1, kind: input, shape index: {}]
  %s2 = inlined_call_operand.vmem [shape: f32[1,32], index: 2, kind: input, shape index: {}]
  %s3 = inlined_call_operand.vmem [shape: bf16[16,32], index: 3, kind: output, shape index: {}]
  %s4 = sld [smem:[#allocation0]]
  $region30: #{mha_forward.4} parent=0
    _
  %s6 = ssub.s32 1, %s4
  %s7 = scalar_select 0, %s6, %s4
  // Predicated region
  $region2: #{mha_forward.4} parent=0 // pred_check
    _
  $region3: #{mha_forward.4} parent=0 // pred_check_branch
    %9 = sbr.rel (0) target = $region5
  $region4: #{mha_forward.4} parent=0 // pred_region
    _
  $region5: #{mha_forward.4} parent=0 // pred_fallthru
    _
  // Predicated region
  $region6: #{mha_forward.4} parent=0 // pred_check
    _
  $region7: #{mha_forward.4} parent=0 // pred_check_branch
    %11 = sbr.rel (0) target = $region9
  $region8: #{mha_forward.4} parent=0 // pred_region
    _
  $region9: #{mha_forward.4} parent=0 // pred_fallthru
    _
  // Predicated region
  $region10: #{mha_forward.4} parent=0 // pred_check
    _
  $region11: #{mha_forward.4} parent=0 // pred_check_branch
    %13 = sbr.rel (0) target = $region13
  $region12: #{mha_forward.4} parent=0 // pred_region
    _
  $region13: #{mha_forward.4} parent=0 // pred_fallthru
    _
  %p15 = scmp.eq.s32.totalorder 0, 0
  // Predicated region
  $region14: #{mha_forward.4} parent=0 // pred_check
    %p16 = pneg %p15
  $region15: #{mha_forward.4} parent=0 // pred_check_branch
    %18 = sbr.rel (%p16) target = $region17
  $region16: #{mha_forward.4} parent=0 // pred_region
    %vm19 = vcmask 261120
    %20 = vst.msk [vmem:[#allocation2] sm:$0xff] %vm19, 0.0
    %21 = vst.msk [vmem:[#allocation2 + $0x8] sm:$0xff] %vm19, 0.0
  $region17: #{mha_forward.4} parent=0 // pred_fallthru
    _
  %v22 = vld [vmem:[#allocation2] sm:$0xff]
  %v23 = vld [vmem:[#allocation2 + $0x8] sm:$0xff]
  %v24 = vld [vmem:[%s0] sm:$0xf]
  %v25 = vld [vmem:[%s0 + $0x4] sm:$0xf]
  %v26 = vld [vmem:[%s1] sm:$0xf]
  %v27 = vld [vmem:[%s1 + $0x4] sm:$0xf]
  %v28 = vld [vmem:[%s1 + $0x8] sm:$0xf]
  %v29 = vld [vmem:[%s1 + $0xc] sm:$0xf]
  %v32 = vunpack.c.l.b16 %v24
  %v33 = vunpack.c.l.b16 %v25
  %v34 = vpack.c.b16 %v33, %v32
  %v39 = vunpack.c.l.b16 %v26
  %v40 = vunpack.c.l.b16 %v27
  %v41 = vunpack.c.l.b16 %v28
  %v42 = vunpack.c.l.b16 %v29
  %v43 = vpack.c.b16 %v40, %v39
  %v44 = vpack.c.b16 %v42, %v41
  %vm47 = vcmask 261120
  %v49 = vsel %vm47, %v34, 0
  %51 = vmatprep.subr.bf16.mxu0 0
  %52 = vmatpush1.bf16.msra.mxu0 0
  %53 = vmatprep.subr.bf16.mxu0 0
  %54 = vmatpush1.bf16.msra.mxu0 0
  %55 = vmatprep.subr.bf16.mxu0 0
  %56 = vmatpush1.bf16.msra.mxu0 0
  %57 = vmatprep.subr.bf16.mxu0 0
  %58 = vmatpush1.bf16.msra.mxu0 0
  %59 = vmatprep.subr.bf16.mxu0 0
  %60 = vmatpush1.bf16.msra.mxu0 0
  %61 = vmatprep.subr.bf16.mxu0 0
  %62 = vmatpush1.bf16.msra.mxu0 0
  %63 = vmatprep.subr.bf16.mxu0 0
  %64 = vmatpush1.bf16.msra.mxu0 %v44
  %65 = vmatprep.subr.bf16.mxu0 0
  %66 = vmatpush1.bf16.msra.mxu0 %v43
  %67 = vmatprep.subr.bf16.mxu0 0
  %68 = vmatpush2.bf16.msra.mxu0 0
  %69 = vmatprep.subr.bf16.mxu0 0
  %70 = vmatpush2.bf16.msra.mxu0 0
  %71 = vmatprep.subr.bf16.mxu0 0
  %72 = vmatpush2.bf16.msra.mxu0 0
  %73 = vmatprep.subr.bf16.mxu0 0
  %74 = vmatpush2.bf16.msra.mxu0 0
  %75 = vmatprep.subr.bf16.mxu0 0
  %76 = vmatpush2.bf16.msra.mxu0 0
  %77 = vmatprep.subr.bf16.mxu0 0
  %78 = vmatpush2.bf16.msra.mxu0 0
  %79 = vmatprep.subr.bf16.mxu0 0
  %80 = vmatpush2.bf16.msra.mxu0 0
  %81 = vmatprep.subr.bf16.mxu0 0
  %82 = vmatpush2.bf16.msra.mxu0 0
  %83 = vmatprep.mubr.bf16.mxu0 0
  %84 = vmatmul.mubr.bf16.gmra.mxu0 %v49
  %v85 = vpop.f32.mrf.mxu0
  %v86 = vadd.f32 0.0, %v85
  %v87 = vpop.f32.mrf.mxu0
  %v88 = vpop.f32.mrf.mxu0
  %v89 = vadd.f32 0.0, %v88
  %v90 = vpop.f32.mrf.mxu0
  %91 = vdwg.mxu0
  %v92 = vadd.f32 %v22, %v86
  %v93 = vadd.f32 %v23, %v89
  %94 = vst.msk [vmem:[#allocation2] sm:$0xff] %vm47, %v92
  %95 = vst.msk [vmem:[#allocation2 + $0x8] sm:$0xff] %vm47, %v93
  // Predicated region
  $region18: #{mha_forward.4} parent=0 // pred_check
    %p96 = pneg %p15
  $region19: #{mha_forward.4} parent=0 // pred_check_branch
    %98 = sbr.rel (%p96) target = $region21
  $region20: #{mha_forward.4} parent=0 // pred_region
    %v99 = vld [vmem:[#allocation2] sm:$0xff]
    %v100 = vld [vmem:[#allocation2 + $0x8] sm:$0xff]
    %v101 = vld [vmem:[%s2] sm:$0x1]
    %v103 = vlaneseq
    %v104 = vshrl.u32 %v103, 7
    %v105 = vsub.s32 0, %v104
    %v106 = vrot.slane %v101, %v105
    %v108 = vadd.f32 %v99, %v106
    %v109 = vadd.f32 %v100, %v106
    %v110 = vpack.c.bf16 %v109, %v108
    %v112 = vunpack.c.l.b16 %v110
    %v113 = vunpack.c.h.b16 %v110
    %v114 = vpack.c.b16 %v112, %v112
    %v115 = vpack.c.b16 %v113, %v113
    %vm118 = vcmask 257024
    %119 = vst.msk [vmem:[%s3] sm:$0xf] %vm118, %v114
    %120 = vst.msk [vmem:[%s3 + $0x4] sm:$0xf] %vm118, %v115
  $region21: #{mha_forward.4} parent=0 // pred_fallthru
    _
  // Predicated region
  $region22: #{mha_forward.4} parent=0 // pred_check
    _
  $region23: #{mha_forward.4} parent=0 // pred_check_branch
    %122 = sbr.rel (0) target = $region25
  $region24: #{mha_forward.4} parent=0 // pred_region
    _
  $region25: #{mha_forward.4} parent=0 // pred_fallthru
    _
  // Predicated region
  $region26: #{mha_forward.4} parent=0 // pred_check
    _
  $region27: #{mha_forward.4} parent=0 // pred_check_branch
    %124 = sbr.rel (0) target = $region29
  $region28: #{mha_forward.4} parent=0 // pred_region
    _
  $region29: #{mha_forward.4} parent=0 // pred_fallthru
    _

// kernel: mha_forward.5
$region0: #{mha_forward.5}
  #allocation0 [shape = 'u32[]', space=smem, size = 0x4, offset = 0x4, fixed_abs, tag = 'smem constant byte address 0x4 - core index']
  #allocation1 [shape = 'u32[144,128]{1,0:T(1,128)}', space=vmem, size = 0x12000, scoped, tag = 'internal scratch']
  #allocation2 [shape = 'f32[16,64]{1,0:T(8,128)}', space=vmem, size = 0x2000, scoped, tag = 'scratch operand']
  %s0 = inlined_call_operand.vmem [shape: bf16[16,32], index: 0, kind: input, shape index: {}]
  %s1 = inlined_call_operand.vmem [shape: bf16[32,64], index: 1, kind: input, shape index: {}]
  %s2 = inlined_call_operand.vmem [shape: f32[1,64], index: 2, kind: input, shape index: {}]
  %s3 = inlined_call_operand.vmem [shape: bf16[16,64], index: 3, kind: output, shape index: {}]
  %s4 = sld [smem:[#allocation0]]
  $region30: #{mha_forward.5} parent=0
    _
  %s6 = ssub.s32 1, %s4
  %s7 = scalar_select 0, %s6, %s4
  // Predicated region
  $region2: #{mha_forward.5} parent=0 // pred_check
    _
  $region3: #{mha_forward.5} parent=0 // pred_check_branch
    %9 = sbr.rel (0) target = $region5
  $region4: #{mha_forward.5} parent=0 // pred_region
    _
  $region5: #{mha_forward.5} parent=0 // pred_fallthru
    _
  // Predicated region
  $region6: #{mha_forward.5} parent=0 // pred_check
    _
  $region7: #{mha_forward.5} parent=0 // pred_check_branch
    %11 = sbr.rel (0) target = $region9
  $region8: #{mha_forward.5} parent=0 // pred_region
    _
  $region9: #{mha_forward.5} parent=0 // pred_fallthru
    _
  // Predicated region
  $region10: #{mha_forward.5} parent=0 // pred_check
    _
  $region11: #{mha_forward.5} parent=0 // pred_check_branch
    %13 = sbr.rel (0) target = $region13
  $region12: #{mha_forward.5} parent=0 // pred_region
    _
  $region13: #{mha_forward.5} parent=0 // pred_fallthru
    _
  %p15 = scmp.eq.s32.totalorder 0, 0
  // Predicated region
  $region14: #{mha_forward.5} parent=0 // pred_check
    %p16 = pneg %p15
  $region15: #{mha_forward.5} parent=0 // pred_check_branch
    %18 = sbr.rel (%p16) target = $region17
  $region16: #{mha_forward.5} parent=0 // pred_region
    %vm19 = vcmask 523264
    %20 = vst.msk [vmem:[#allocation2] sm:$0xff] %vm19, 0.0
    %21 = vst.msk [vmem:[#allocation2 + $0x8] sm:$0xff] %vm19, 0.0
  $region17: #{mha_forward.5} parent=0 // pred_fallthru
    _
  %v22 = vld [vmem:[#allocation2] sm:$0xff]
  %v23 = vld [vmem:[#allocation2 + $0x8] sm:$0xff]
  %v24 = vld [vmem:[%s0] sm:$0xf]
  %v25 = vld [vmem:[%s0 + $0x4] sm:$0xf]
  %v26 = vld [vmem:[%s1] sm:$0xf]
  %v27 = vld [vmem:[%s1 + $0x4] sm:$0xf]
  %v28 = vld [vmem:[%s1 + $0x8] sm:$0xf]
  %v29 = vld [vmem:[%s1 + $0xc] sm:$0xf]
  %v32 = vunpack.c.l.b16 %v24
  %v33 = vunpack.c.l.b16 %v25
  %v34 = vpack.c.b16 %v33, %v32
  %v39 = vunpack.c.l.b16 %v26
  %v40 = vunpack.c.l.b16 %v27
  %v41 = vunpack.c.l.b16 %v28
  %v42 = vunpack.c.l.b16 %v29
  %v43 = vpack.c.b16 %v40, %v39
  %v44 = vpack.c.b16 %v42, %v41
  %vm47 = vcmask 261120
  %v49 = vsel %vm47, %v34, 0
  %51 = vmatprep.subr.bf16.mxu0 0
  %52 = vmatpush1.bf16.msra.mxu0 0
  %53 = vmatprep.subr.bf16.mxu0 0
  %54 = vmatpush1.bf16.msra.mxu0 0
  %55 = vmatprep.subr.bf16.mxu0 0
  %56 = vmatpush1.bf16.msra.mxu0 0
  %57 = vmatprep.subr.bf16.mxu0 0
  %58 = vmatpush1.bf16.msra.mxu0 0
  %59 = vmatprep.subr.bf16.mxu0 0
  %60 = vmatpush1.bf16.msra.mxu0 0
  %61 = vmatprep.subr.bf16.mxu0 0
  %62 = vmatpush1.bf16.msra.mxu0 0
  %63 = vmatprep.subr.bf16.mxu0 0
  %64 = vmatpush1.bf16.msra.mxu0 %v44
  %65 = vmatprep.subr.bf16.mxu0 0
  %66 = vmatpush1.bf16.msra.mxu0 %v43
  %67 = vmatprep.subr.bf16.mxu0 0
  %68 = vmatpush2.bf16.msra.mxu0 0
  %69 = vmatprep.subr.bf16.mxu0 0
  %70 = vmatpush2.bf16.msra.mxu0 0
  %71 = vmatprep.subr.bf16.mxu0 0
  %72 = vmatpush2.bf16.msra.mxu0 0
  %73 = vmatprep.subr.bf16.mxu0 0
  %74 = vmatpush2.bf16.msra.mxu0 0
  %75 = vmatprep.subr.bf16.mxu0 0
  %76 = vmatpush2.bf16.msra.mxu0 0
  %77 = vmatprep.subr.bf16.mxu0 0
  %78 = vmatpush2.bf16.msra.mxu0 0
  %79 = vmatprep.subr.bf16.mxu0 0
  %80 = vmatpush2.bf16.msra.mxu0 0
  %81 = vmatprep.subr.bf16.mxu0 0
  %82 = vmatpush2.bf16.msra.mxu0 0
  %83 = vmatprep.mubr.bf16.mxu0 0
  %84 = vmatmul.mubr.bf16.gmra.mxu0 %v49
  %v85 = vpop.f32.mrf.mxu0
  %v86 = vadd.f32 0.0, %v85
  %v87 = vpop.f32.mrf.mxu0
  %v88 = vpop.f32.mrf.mxu0
  %v89 = vadd.f32 0.0, %v88
  %v90 = vpop.f32.mrf.mxu0
  %91 = vdwg.mxu0
  %v92 = vadd.f32 %v22, %v86
  %v93 = vadd.f32 %v23, %v89
  %vm94 = vcmask 523264
  %95 = vst.msk [vmem:[#allocation2] sm:$0xff] %vm94, %v92
  %96 = vst.msk [vmem:[#allocation2 + $0x8] sm:$0xff] %vm94, %v93
  // Predicated region
  $region18: #{mha_forward.5} parent=0 // pred_check
    %p97 = pneg %p15
  $region19: #{mha_forward.5} parent=0 // pred_check_branch
    %99 = sbr.rel (%p97) target = $region21
  $region20: #{mha_forward.5} parent=0 // pred_region
    %v100 = vld [vmem:[#allocation2] sm:$0xff]
    %v101 = vld [vmem:[#allocation2 + $0x8] sm:$0xff]
    %v102 = vld [vmem:[%s2] sm:$0x1]
    %v104 = vlaneseq
    %v105 = vshrl.u32 %v104, 7
    %v106 = vsub.s32 0, %v105
    %v107 = vrot.slane %v102, %v106
    %v109 = vadd.f32 %v100, %v107
    %v110 = vadd.f32 %v101, %v107
    %v111 = vpack.c.bf16 %v110, %v109
    %v113 = vunpack.c.l.b16 %v111
    %v114 = vunpack.c.h.b16 %v111
    %v115 = vpack.c.b16 %v113, %v113
    %v116 = vpack.c.b16 %v114, %v114
    %vm119 = vcmask 519168
    %120 = vst.msk [vmem:[%s3] sm:$0xf] %vm119, %v115
    %121 = vst.msk [vmem:[%s3 + $0x4] sm:$0xf] %vm119, %v116
  $region21: #{mha_forward.5} parent=0 // pred_fallthru
    _
  // Predicated region
  $region22: #{mha_forward.5} parent=0 // pred_check
    _
  $region23: #{mha_forward.5} parent=0 // pred_check_branch
    %123 = sbr.rel (0) target = $region25
  $region24: #{mha_forward.5} parent=0 // pred_region
    _
  $region25: #{mha_forward.5} parent=0 // pred_fallthru
    _
  // Predicated region
  $region26: #{mha_forward.5} parent=0 // pred_check
    _
  $region27: #{mha_forward.5} parent=0 // pred_check_branch
    %125 = sbr.rel (0) target = $region29
  $region28: #{mha_forward.5} parent=0 // pred_region
    _
  $region29: #{mha_forward.5} parent=0 // pred_fallthru
    _

// kernel: mha_forward.7
$region0: #{mha_forward.7}
  #allocation0 [shape = 'u32[]', space=smem, size = 0x4, offset = 0x4, fixed_abs, tag = 'smem constant byte address 0x4 - core index']
  #allocation1 [shape = 'u32[144,128]{1,0:T(1,128)}', space=vmem, size = 0x12000, scoped, tag = 'internal scratch']
  #allocation2 [shape = 'f32[16,32]{1,0:T(8,128)}', space=vmem, size = 0x2000, scoped, tag = 'scratch operand']
  %s0 = inlined_call_operand.vmem [shape: bf16[16,32], index: 0, kind: input, shape index: {}]
  %s1 = inlined_call_operand.vmem [shape: bf16[32,32], index: 1, kind: input, shape index: {}]
  %s2 = inlined_call_operand.vmem [shape: f32[1,32], index: 2, kind: input, shape index: {}]
  %s3 = inlined_call_operand.hbm [shape: f32[16,32], index: 3, kind: output, shape index: {}]
  %s4 = sld [smem:[#allocation0]]
  $region30: #{mha_forward.7} parent=0
    _
  %s6 = ssub.s32 1, %s4
  %s7 = scalar_select 0, %s6, %s4
  $region1: #{mha_forward.7} parent=0
    #allocation3 [shape = 'u8[8192]{0}', space=vmem, size = 0x2000, scoped, tag = 'output window, operand 0, single buffered']
    #allocation4 [shape = 's32[1]{0}', space=sflag, size = 0x4, scoped, tag = 'scoped memory for mha_forward.7']
    %8 = vsyncpa [#allocation4], 0
    // Predicated region
    $region2: #{mha_forward.7} parent=1 // pred_check
      _
    $region3: #{mha_forward.7} parent=1 // pred_check_branch
      %10 = sbr.rel (0) target = $region5
    $region4: #{mha_forward.7} parent=1 // pred_region
      _
    $region5: #{mha_forward.7} parent=1 // pred_fallthru
      _
    // Predicated region
    $region6: #{mha_forward.7} parent=1 // pred_check
      _
    $region7: #{mha_forward.7} parent=1 // pred_check_branch
      %12 = sbr.rel (0) target = $region9
    $region8: #{mha_forward.7} parent=1 // pred_region
      _
    $region9: #{mha_forward.7} parent=1 // pred_fallthru
      _
    // Predicated region
    $region10: #{mha_forward.7} parent=1 // pred_check
      _
    $region11: #{mha_forward.7} parent=1 // pred_check_branch
      %14 = sbr.rel (0) target = $region13
    $region12: #{mha_forward.7} parent=1 // pred_region
      _
    $region13: #{mha_forward.7} parent=1 // pred_fallthru
      _
    %p16 = scmp.eq.s32.totalorder 0, 0
    // Predicated region
    $region14: #{mha_forward.7} parent=1 // pred_check
      %p17 = pneg %p16
    $region15: #{mha_forward.7} parent=1 // pred_check_branch
      %19 = sbr.rel (%p17) target = $region17
    $region16: #{mha_forward.7} parent=1 // pred_region
      %vm20 = vcmask 261120
      %21 = vst.msk [vmem:[#allocation2] sm:$0xff] %vm20, 0.0
      %22 = vst.msk [vmem:[#allocation2 + $0x8] sm:$0xff] %vm20, 0.0
    $region17: #{mha_forward.7} parent=1 // pred_fallthru
      _
    %v23 = vld [vmem:[#allocation2] sm:$0xff]
    %v24 = vld [vmem:[#allocation2 + $0x8] sm:$0xff]
    %v25 = vld [vmem:[%s0] sm:$0xf]
    %v26 = vld [vmem:[%s0 + $0x4] sm:$0xf]
    %v27 = vld [vmem:[%s1] sm:$0xf]
    %v28 = vld [vmem:[%s1 + $0x4] sm:$0xf]
    %v29 = vld [vmem:[%s1 + $0x8] sm:$0xf]
    %v30 = vld [vmem:[%s1 + $0xc] sm:$0xf]
    %v33 = vunpack.c.l.b16 %v25
    %v34 = vunpack.c.l.b16 %v26
    %v35 = vpack.c.b16 %v34, %v33
    %v40 = vunpack.c.l.b16 %v27
    %v41 = vunpack.c.l.b16 %v28
    %v42 = vunpack.c.l.b16 %v29
    %v43 = vunpack.c.l.b16 %v30
    %v44 = vpack.c.b16 %v41, %v40
    %v45 = vpack.c.b16 %v43, %v42
    %vm48 = vcmask 261120
    %v50 = vsel %vm48, %v35, 0
    %52 = vmatprep.subr.bf16.mxu0 0
    %53 = vmatpush1.bf16.msra.mxu0 0
    %54 = vmatprep.subr.bf16.mxu0 0
    %55 = vmatpush1.bf16.msra.mxu0 0
    %56 = vmatprep.subr.bf16.mxu0 0
    %57 = vmatpush1.bf16.msra.mxu0 0
    %58 = vmatprep.subr.bf16.mxu0 0
    %59 = vmatpush1.bf16.msra.mxu0 0
    %60 = vmatprep.subr.bf16.mxu0 0
    %61 = vmatpush1.bf16.msra.mxu0 0
    %62 = vmatprep.subr.bf16.mxu0 0
    %63 = vmatpush1.bf16.msra.mxu0 0
    %64 = vmatprep.subr.bf16.mxu0 0
    %65 = vmatpush1.bf16.msra.mxu0 %v45
    %66 = vmatprep.subr.bf16.mxu0 0
    %67 = vmatpush1.bf16.msra.mxu0 %v44
    %68 = vmatprep.subr.bf16.mxu0 0
    %69 = vmatpush2.bf16.msra.mxu0 0
    %70 = vmatprep.subr.bf16.mxu0 0
    %71 = vmatpush2.bf16.msra.mxu0 0
    %72 = vmatprep.subr.bf16.mxu0 0
    %73 = vmatpush2.bf16.msra.mxu0 0
    %74 = vmatprep.subr.bf16.mxu0 0
    %75 = vmatpush2.bf16.msra.mxu0 0
    %76 = vmatprep.subr.bf16.mxu0 0
    %77 = vmatpush2.bf16.msra.mxu0 0
    %78 = vmatprep.subr.bf16.mxu0 0
    %79 = vmatpush2.bf16.msra.mxu0 0
    %80 = vmatprep.subr.bf16.mxu0 0
    %81 = vmatpush2.bf16.msra.mxu0 0
    %82 = vmatprep.subr.bf16.mxu0 0
    %83 = vmatpush2.bf16.msra.mxu0 0
    %84 = vmatprep.mubr.bf16.mxu0 0
    %85 = vmatmul.mubr.bf16.gmra.mxu0 %v50
    %v86 = vpop.f32.mrf.mxu0
    %v87 = vadd.f32 0.0, %v86
    %v88 = vpop.f32.mrf.mxu0
    %v89 = vpop.f32.mrf.mxu0
    %v90 = vadd.f32 0.0, %v89
    %v91 = vpop.f32.mrf.mxu0
    %92 = vdwg.mxu0
    %v93 = vadd.f32 %v23, %v87
    %v94 = vadd.f32 %v24, %v90
    %95 = vst.msk [vmem:[#allocation2] sm:$0xff] %vm48, %v93
    %96 = vst.msk [vmem:[#allocation2 + $0x8] sm:$0xff] %vm48, %v94
    // Predicated region
    $region18: #{mha_forward.7} parent=1 // pred_check
      %p97 = pneg %p16
    $region19: #{mha_forward.7} parent=1 // pred_check_branch
      %99 = sbr.rel (%p97) target = $region21
    $region20: #{mha_forward.7} parent=1 // pred_region
      %v100 = vld [vmem:[#allocation2] sm:$0xff]
      %v101 = vld [vmem:[#allocation2 + $0x8] sm:$0xff]
      %v102 = vld [vmem:[%s2] sm:$0x1]
      %v104 = vlaneseq
      %v105 = vshrl.u32 %v104, 7
      %v106 = vsub.s32 0, %v105
      %v107 = vrot.slane %v102, %v106
      %v109 = vadd.f32 %v100, %v107
      %v110 = vadd.f32 %v101, %v107
      %111 = vst.msk [vmem:[#allocation3] sm:$0xff] %vm48, %v109
      %112 = vst.msk [vmem:[#allocation3 + $0x8] sm:$0xff] %vm48, %v110
    $region21: #{mha_forward.7} parent=1 // pred_fallthru
      _
    // Predicated region
    $region22: #{mha_forward.7} parent=1 // pred_check
      _
    $region23: #{mha_forward.7} parent=1 // pred_check_branch
      %114 = sbr.rel (0) target = $region25
    $region24: #{mha_forward.7} parent=1 // pred_region
      %s116 = ssub.s32 256, 256
      %117 = vsyncadd [#allocation4], %s116
      %s118 = sshll.u32 [#allocation3], 4
      %s119 = int_to_ptr.vmem [resolvable:$true] %s118
      %124 = dma.vmem_to_hbm [thread:$0]  %s119, 256, %s3, [#allocation4], 128, 128, 8
    $region25: #{mha_forward.7} parent=1 // pred_fallthru
      _
    // Predicated region
    $region26: #{mha_forward.7} parent=1 // pred_check
      _
    $region27: #{mha_forward.7} parent=1 // pred_check_branch
      %126 = sbr.rel (0) target = $region29
    $region28: #{mha_forward.7} parent=1 // pred_region
      %127 = dma.done [#allocation4], 256
    $region29: #{mha_forward.7} parent=1 // pred_fallthru
      _
    %128 = vsyncpa [#allocation4], 1

// kernel: mha_forward.6
$region0: #{mha_forward.6}
  #allocation0 [shape = 'u32[]', space=smem, size = 0x4, offset = 0x4, fixed_abs, tag = 'smem constant byte address 0x4 - core index']
  #allocation1 [shape = 'u32[144,128]{1,0:T(1,128)}', space=vmem, size = 0x12000, scoped, tag = 'internal scratch']
  #allocation2 [shape = 'f32[4,16,1]{2,1,0:T(8,128)}', space=vmem, size = 0x8000, scoped, tag = 'scratch operand']
  #allocation3 [shape = 'f32[4,16,1]{2,1,0:T(8,128)}', space=vmem, size = 0x8000, scoped, tag = 'scratch operand']
  #allocation4 [shape = 'f32[4,16,8]{2,1,0:T(8,128)}', space=vmem, size = 0x8000, scoped, tag = 'scratch operand']
  %s0 = inlined_call_operand.vmem [shape: bf16[2,16,32], index: 0, kind: input, shape index: {}]
  %s1 = inlined_call_operand.vmem [shape: bf16[2,16,32], index: 1, kind: input, shape index: {}]
  %s2 = inlined_call_operand.vmem [shape: bf16[2,16,32], index: 2, kind: input, shape index: {}]
  %s3 = inlined_call_operand.vmem [shape: bf16[2,16,32], index: 3, kind: output, shape index: {}]
  %s4 = sld [smem:[#allocation0]]
  $region53: #{mha_forward.6} parent=0
    _
  %s6 = ssub.s32 1, %s4
  %s7 = scalar_select 0, %s6, %s4
  loop: start=0, step=1, limit=4
  $region2: #{mha_forward.6} parent=0 // loop_pre_header
    _
  $region3: #{mha_forward.6} parent=0 // loop_header
    %s9 = sphi 0, %s13
    %p10 = scmp.ge.s32.totalorder %s9, 4
    %s16 = sphi 0, %s35
    %s17 = sphi 0, %s31
    %s18 = sphi 0, %s27
    %s19 = sphi 0, %s16
    %s20 = sphi 0, %s17
    %s21 = sphi 0, %s18
    %s22 = sphi 0, %s19
    %s23 = sphi 0, %s20
    %s24 = sphi 0, %s21
    %s40 = sphi 0, %s42
    %s43 = sphi 0, %s40
    %s44 = sphi 0, %s43
    %s60 = sphi 0, %s44
    %s68 = sphi 0, %s70
    %s71 = sphi 0, %s68
    %s72 = sphi 0, %s71
    %s88 = sphi 0, %s72
    %s96 = sphi 0, %s98
    %s99 = sphi 0, %s96
    %s100 = sphi 0, %s99
    %s116 = sphi 0, %s100
    %s124 = sphi 0, %s126
    %s127 = sphi 0, %s124
    %s128 = sphi 0, %s127
    %s144 = sphi 0, %s128
  $region4: #{mha_forward.6} parent=0 // loop_header_branch
    %12 = sbr.rel (%p10) target = $region8
  $region5: #{mha_forward.6} parent=0 // loop_body
    %s14 = ssub.s32 %s9, 1
    %s15 = ssub.s32 %s9, 2
    %s25 = sadd.s32 1, %s18
    %p26 = scmp.ge.s32.totalorder %s25, 1
    %s27 = scalar_select %p26, 0, %s25
    %s28 = sadd.s32 1, %s17
    %s29 = scalar_select %p26, %s28, %s17
    %p30 = scmp.ge.s32.totalorder %s29, 1
    %s31 = scalar_select %p30, 0, %s29
    %s32 = sadd.s32 1, %s16
    %s33 = scalar_select %p30, %s32, %s16
    %p34 = scmp.ge.s32.totalorder %s33, 2
    %s35 = scalar_select %p34, 0, %s33
    %s36 = ssub.s32 %s16, %s35
    %s37 = ssub.s32 %s17, %s31
    %s38 = sor.u32 %s36, %s37
    %p39 = scmp.eq.s32.totalorder %s38, 0
    %s41 = sadd.s32 %s40, 1
    %s42 = scalar_select %p39, %s40, %s41
    %p45 = pneg %p39
    %p46 = scmp.eq.s32.totalorder %s9, 1
    %p47 = por %p45, %p46
    %p48 = scmp.ne.s32.totalorder %s40, %s43
    %p49 = scmp.eq.s32.totalorder %s9, 0
    %p50 = por %p48, %p49
    %p51 = scmp.ne.s32.totalorder %s40, %s43
    %p52 = scmp.eq.s32.totalorder %s14, 1
    %p53 = por %p51, %p52
    %p54 = scmp.ne.s32.totalorder %s43, %s44
    %p55 = scmp.eq.s32.totalorder %s14, 0
    %p56 = por %p54, %p55
    %p57 = scmp.ne.s32.totalorder %s43, %s44
    %p58 = scmp.eq.s32.totalorder %s15, 1
    %p59 = por %p57, %p58
    %p61 = scmp.ne.s32.totalorder %s44, %s60
    %p62 = scmp.eq.s32.totalorder %s15, 0
    %p63 = por %p61, %p62
    %s64 = ssub.s32 %s16, %s35
    %s65 = ssub.s32 %s18, %s27
    %s66 = sor.u32 %s64, %s65
    %p67 = scmp.eq.s32.totalorder %s66, 0
    %s69 = sadd.s32 %s68, 1
    %s70 = scalar_select %p67, %s68, %s69
    %p73 = pneg %p67
    %p74 = scmp.eq.s32.totalorder %s9, 1
    %p75 = por %p73, %p74
    %p76 = scmp.ne.s32.totalorder %s68, %s71
    %p77 = scmp.eq.s32.totalorder %s9, 0
    %p78 = por %p76, %p77
    %p79 = scmp.ne.s32.totalorder %s68, %s71
    %p80 = scmp.eq.s32.totalorder %s14, 1
    %p81 = por %p79, %p80
    %p82 = scmp.ne.s32.totalorder %s71, %s72
    %p83 = scmp.eq.s32.totalorder %s14, 0
    %p84 = por %p82, %p83
    %p85 = scmp.ne.s32.totalorder %s71, %s72
    %p86 = scmp.eq.s32.totalorder %s15, 1
    %p87 = por %p85, %p86
    %p89 = scmp.ne.s32.totalorder %s72, %s88
    %p90 = scmp.eq.s32.totalorder %s15, 0
    %p91 = por %p89, %p90
    %s92 = ssub.s32 %s16, %s35
    %s93 = ssub.s32 %s18, %s27
    %s94 = sor.u32 %s92, %s93
    %p95 = scmp.eq.s32.totalorder %s94, 0
    %s97 = sadd.s32 %s96, 1
    %s98 = scalar_select %p95, %s96, %s97
    %p101 = pneg %p95
    %p102 = scmp.eq.s32.totalorder %s9, 1
    %p103 = por %p101, %p102
    %p104 = scmp.ne.s32.totalorder %s96, %s99
    %p105 = scmp.eq.s32.totalorder %s9, 0
    %p106 = por %p104, %p105
    %p107 = scmp.ne.s32.totalorder %s96, %s99
    %p108 = scmp.eq.s32.totalorder %s14, 1
    %p109 = por %p107, %p108
    %p110 = scmp.ne.s32.totalorder %s99, %s100
    %p111 = scmp.eq.s32.totalorder %s14, 0
    %p112 = por %p110, %p111
    %p113 = scmp.ne.s32.totalorder %s99, %s100
    %p114 = scmp.eq.s32.totalorder %s15, 1
    %p115 = por %p113, %p114
    %p117 = scmp.ne.s32.totalorder %s100, %s116
    %p118 = scmp.eq.s32.totalorder %s15, 0
    %p119 = por %p117, %p118
    %s120 = ssub.s32 %s16, %s35
    %s121 = ssub.s32 %s17, %s31
    %s122 = sor.u32 %s120, %s121
    %p123 = scmp.eq.s32.totalorder %s122, 0
    %s125 = sadd.s32 %s124, 1
    %s126 = scalar_select %p123, %s124, %s125
    %p129 = pneg %p123
    %p130 = scmp.eq.s32.totalorder %s9, 1
    %p131 = por %p129, %p130
    %p132 = scmp.ne.s32.totalorder %s124, %s127
    %p133 = scmp.eq.s32.totalorder %s9, 0
    %p134 = por %p132, %p133
    %p135 = scmp.ne.s32.totalorder %s124, %s127
    %p136 = scmp.eq.s32.totalorder %s14, 1
    %p137 = por %p135, %p136
    %p138 = scmp.ne.s32.totalorder %s127, %s128
    %p139 = scmp.eq.s32.totalorder %s14, 0
    %p140 = por %p138, %p139
    %p141 = scmp.ne.s32.totalorder %s127, %s128
    %p142 = scmp.eq.s32.totalorder %s15, 1
    %p143 = por %p141, %p142
    %p145 = scmp.ne.s32.totalorder %s128, %s144
    %p146 = scmp.eq.s32.totalorder %s15, 0
    %p147 = por %p145, %p146
    %p148 = scmp.le.s32.totalorder 1, %s9
    %p149 = scmp.lt.s32.totalorder %s9, 3
    %p150 = pnand %p148, %p149
    %p151 = pneg %p150
    // Predicated region
    $region9: #{mha_forward.6} parent=5 // pred_check
      _
    $region10: #{mha_forward.6} parent=5 // pred_check_branch
      %153 = sbr.rel (%p150) target = $region12
    $region11: #{mha_forward.6} parent=5 // pred_region
      %s154 = ssub.s32 %s9, 1
    $region12: #{mha_forward.6} parent=5 // pred_fallthru
      _
    %p155 = scmp.lt.s32.totalorder %s9, 2
    // Predicated region
    $region13: #{mha_forward.6} parent=5 // pred_check
      %p156 = pneg %p155
    $region14: #{mha_forward.6} parent=5 // pred_check_branch
      %158 = sbr.rel (%p156) target = $region16
    $region15: #{mha_forward.6} parent=5 // pred_region
      // Predicated region
      $region17: #{mha_forward.6} parent=15 // pred_check
        %p159 = pneg %p50
      $region18: #{mha_forward.6} parent=15 // pred_check_branch
        %161 = sbr.rel (%p159) target = $region20
      $region19: #{mha_forward.6} parent=15 // pred_region
        %s162 = smul.u32 2, %s17
        %p163 = scmp.lt.s32.totalorder %s16, 1
        %s164 = scalar_select %p163, %s16, 1
        %p165 = scmp.lt.s32.totalorder %s162, 1
        %s166 = scalar_select %p165, %s162, 1
        %s167 = smul.addr %s164, 2
        %s168 = sadd.s32 %s166, %s167
        %s169 = smul.addr %s168, 4
        %s170 = scalar_lea.vmem %s0, %s169
        %s171 = smul.u32 2, %s17
      $region20: #{mha_forward.6} parent=15 // pred_fallthru
        _
      // Predicated region
      $region21: #{mha_forward.6} parent=15 // pred_check
        %p172 = pneg %p78
      $region22: #{mha_forward.6} parent=15 // pred_check_branch
        %174 = sbr.rel (%p172) target = $region24
      $region23: #{mha_forward.6} parent=15 // pred_region
        %s175 = smul.u32 2, %s18
        %p176 = scmp.lt.s32.totalorder %s16, 1
        %s177 = scalar_select %p176, %s16, 1
        %p178 = scmp.lt.s32.totalorder %s175, 1
        %s179 = scalar_select %p178, %s175, 1
        %s180 = smul.addr %s177, 2
        %s181 = sadd.s32 %s179, %s180
        %s182 = smul.addr %s181, 4
        %s183 = scalar_lea.vmem %s1, %s182
        %s184 = smul.u32 2, %s18
      $region24: #{mha_forward.6} parent=15 // pred_fallthru
        _
      // Predicated region
      $region25: #{mha_forward.6} parent=15 // pred_check
        %p185 = pneg %p106
      $region26: #{mha_forward.6} parent=15 // pred_check_branch
        %187 = sbr.rel (%p185) target = $region28
      $region27: #{mha_forward.6} parent=15 // pred_region
        %s188 = smul.u32 2, %s18
        %p189 = scmp.lt.s32.totalorder %s16, 1
        %s190 = scalar_select %p189, %s16, 1
        %p191 = scmp.lt.s32.totalorder %s188, 1
        %s192 = scalar_select %p191, %s188, 1
        %s193 = smul.addr %s190, 2
        %s194 = sadd.s32 %s192, %s193
        %s195 = smul.addr %s194, 4
        %s196 = scalar_lea.vmem %s2, %s195
        %s197 = smul.u32 2, %s18
      $region28: #{mha_forward.6} parent=15 // pred_fallthru
        _
    $region16: #{mha_forward.6} parent=5 // pred_fallthru
      _
    %p198 = scmp.le.s32.totalorder 1, %s9
    %p199 = scmp.lt.s32.totalorder %s9, 3
    %p200 = pnand %p198, %p199
    %p201 = pneg %p200
    // Predicated region
    $region29: #{mha_forward.6} parent=5 // pred_check
      _
    $region30: #{mha_forward.6} parent=5 // pred_check_branch
      %203 = sbr.rel (%p200) target = $region32
    $region31: #{mha_forward.6} parent=5 // pred_region
      %s204 = ssub.s32 %s9, 1
      %s205 = smul.u32 2, %s20
      %p206 = scmp.lt.s32.totalorder %s19, 1
      %s207 = scalar_select %p206, %s19, 1
      %p208 = scmp.lt.s32.totalorder %s205, 1
      %s209 = scalar_select %p208, %s205, 1
      %s210 = smul.addr %s207, 2
      %s211 = sadd.s32 %s209, %s210
      %s212 = smul.addr %s211, 4
      %s213 = scalar_lea.vmem %s0, %s212
      %p214 = pneg %p56
      %p215 = pneg %p53
      %s216 = smul.u32 2, %s21
      %p217 = scmp.lt.s32.totalorder %s19, 1
      %s218 = scalar_select %p217, %s19, 1
      %p219 = scmp.lt.s32.totalorder %s216, 1
      %s220 = scalar_select %p219, %s216, 1
      %s221 = smul.addr %s218, 2
      %s222 = sadd.s32 %s220, %s221
      %s223 = smul.addr %s222, 4
      %s224 = scalar_lea.vmem %s1, %s223
      %p225 = pneg %p84
      %p226 = pneg %p81
      %s227 = smul.u32 2, %s21
      %p228 = scmp.lt.s32.totalorder %s19, 1
      %s229 = scalar_select %p228, %s19, 1
      %p230 = scmp.lt.s32.totalorder %s227, 1
      %s231 = scalar_select %p230, %s227, 1
      %s232 = smul.addr %s229, 2
      %s233 = sadd.s32 %s231, %s232
      %s234 = smul.addr %s233, 4
      %s235 = scalar_lea.vmem %s2, %s234
      %p236 = pneg %p112
      %p237 = pneg %p109
      %p238 = pneg %p140
      %p239 = pneg %p137
      %s240 = smul.u32 2, %s20
      %p241 = scmp.lt.s32.totalorder %s19, 1
      %s242 = scalar_select %p241, %s19, 1
      %p243 = scmp.lt.s32.totalorder %s240, 1
      %s244 = scalar_select %p243, %s240, 1
      %s245 = smul.addr %s242, 2
      %s246 = sadd.s32 %s244, %s245
      %s247 = smul.addr %s246, 4
      %s248 = scalar_lea.vmem %s3, %s247
      %s249 = smul.u32 2, %s20
      %p250 = scmp.lt.s32.totalorder %s19, 1
      %s251 = scalar_select %p250, %s19, 1
      %p252 = scmp.lt.s32.totalorder %s249, 1
      %s253 = scalar_select %p252, %s249, 1
      %s254 = smul.addr %s251, 2
      %s255 = sadd.s32 %s253, %s254
      %s256 = smul.addr %s255, 4
      %s257 = scalar_lea.vmem %s0, %s256
      %s258 = smul.u32 2, %s20
      %s259 = smul.u32 2, %s21
      %p260 = scmp.lt.s32.totalorder %s19, 1
      %s261 = scalar_select %p260, %s19, 1
      %p262 = scmp.lt.s32.totalorder %s259, 1
      %s263 = scalar_select %p262, %s259, 1
      %s264 = smul.addr %s261, 2
      %s265 = sadd.s32 %s263, %s264
      %s266 = smul.addr %s265, 4
      %s267 = scalar_lea.vmem %s1, %s266
      %s268 = smul.u32 2, %s21
      %s269 = smul.u32 2, %s21
      %p270 = scmp.lt.s32.totalorder %s19, 1
      %s271 = scalar_select %p270, %s19, 1
      %p272 = scmp.lt.s32.totalorder %s269, 1
      %s273 = scalar_select %p272, %s269, 1
      %s274 = smul.addr %s271, 2
      %s275 = sadd.s32 %s273, %s274
      %s276 = smul.addr %s275, 4
      %s277 = scalar_lea.vmem %s2, %s276
      %s278 = smul.u32 2, %s21
      %s279 = smul.u32 2, %s20
      %p280 = scmp.lt.s32.totalorder %s19, 1
      %s281 = scalar_select %p280, %s19, 1
      %p282 = scmp.lt.s32.totalorder %s279, 1
      %s283 = scalar_select %p282, %s279, 1
      %s284 = smul.addr %s281, 2
      %s285 = sadd.s32 %s283, %s284
      %s286 = smul.addr %s285, 4
      %s287 = scalar_lea.vmem %s3, %s286
      %s288 = smul.u32 2, %s20
      %p290 = scmp.eq.s32.totalorder %s21, 0
      // Predicated region
      $region33: #{mha_forward.6} parent=31 // pred_check
        %p291 = pneg %p290
      $region34: #{mha_forward.6} parent=31 // pred_check_branch
        %293 = sbr.rel (%p291) target = $region36
      $region35: #{mha_forward.6} parent=31 // pred_region
        %vm294 = vcmask 7168
        %295 = vst.msk [vmem:[#allocation2] sm:$0xff] %vm294, -inf
        %296 = vst.msk [vmem:[#allocation2 + $0x8] sm:$0xff] %vm294, -inf
        %297 = vst.msk [vmem:[#allocation2 + $0x10] sm:$0xff] %vm294, -inf
        %298 = vst.msk [vmem:[#allocation2 + $0x18] sm:$0xff] %vm294, -inf
        %299 = vst.msk [vmem:[#allocation2 + $0x20] sm:$0xff] %vm294, -inf
        %300 = vst.msk [vmem:[#allocation2 + $0x28] sm:$0xff] %vm294, -inf
        %301 = vst.msk [vmem:[#allocation2 + $0x30] sm:$0xff] %vm294, -inf
        %302 = vst.msk [vmem:[#allocation2 + $0x38] sm:$0xff] %vm294, -inf
        %303 = vst.msk [vmem:[#allocation3] sm:$0xff] %vm294, 0.0
        %304 = vst.msk [vmem:[#allocation3 + $0x8] sm:$0xff] %vm294, 0.0
        %305 = vst.msk [vmem:[#allocation3 + $0x10] sm:$0xff] %vm294, 0.0
        %306 = vst.msk [vmem:[#allocation3 + $0x18] sm:$0xff] %vm294, 0.0
        %307 = vst.msk [vmem:[#allocation3 + $0x20] sm:$0xff] %vm294, 0.0
        %308 = vst.msk [vmem:[#allocation3 + $0x28] sm:$0xff] %vm294, 0.0
        %309 = vst.msk [vmem:[#allocation3 + $0x30] sm:$0xff] %vm294, 0.0
        %310 = vst.msk [vmem:[#allocation3 + $0x38] sm:$0xff] %vm294, 0.0
        %vm311 = vcmask 64512
        %312 = vst.msk [vmem:[#allocation4] sm:$0xff] %vm311, 0.0
        %313 = vst.msk [vmem:[#allocation4 + $0x8] sm:$0xff] %vm311, 0.0
        %314 = vst.msk [vmem:[#allocation4 + $0x10] sm:$0xff] %vm311, 0.0
        %315 = vst.msk [vmem:[#allocation4 + $0x18] sm:$0xff] %vm311, 0.0
        %316 = vst.msk [vmem:[#allocation4 + $0x20] sm:$0xff] %vm311, 0.0
        %317 = vst.msk [vmem:[#allocation4 + $0x28] sm:$0xff] %vm311, 0.0
        %318 = vst.msk [vmem:[#allocation4 + $0x30] sm:$0xff] %vm311, 0.0
        %319 = vst.msk [vmem:[#allocation4 + $0x38] sm:$0xff] %vm311, 0.0
      $region36: #{mha_forward.6} parent=31 // pred_fallthru
        _
      %v320 = vld [vmem:[%s257] sm:$0xf]
      %v321 = vld [vmem:[%s257 + $0x4] sm:$0xf]
      %v322 = vld [vmem:[%s267] sm:$0xf]
      %v323 = vld [vmem:[%s267 + $0x4] sm:$0xf]
      %v324 = vld [vmem:[%s277] sm:$0xf]
      %v325 = vld [vmem:[%s277 + $0x4] sm:$0xf]
      %s326 = smul.u32 %s21, 16
      %v327 = vlaneseq
      %v328 = vand.u32 %v327, 127
      %v329 = vstv %s326
      %v330 = vadd.s32 %v329, %v328
      %vm331 = vcmp.lt.s32.totalorder %v330, 8
      %v334 = vunpack.c.l.b16 %v320
      %v335 = vunpack.c.l.b16 %v321
      %v336 = vpack.c.b16 %v335, %v334
      %v339 = vunpack.c.l.b16 %v322
      %v340 = vunpack.c.l.b16 %v323
      %v341 = vpack.c.b16 %v340, %v339
      %vm342 = vcmask 64512
      %v344 = vsel %vm342, %v336, 0
      %v347 = vsel %vm342, %v341, 0
      %349 = vmatprep.subr.bf16.mxu0 0
      %350 = vmatpush1.bf16.xpose.msra.mxu0 0
      %351 = vmatprep.subr.bf16.mxu0 0
      %352 = vmatpush1.bf16.xpose.msra.mxu0 0
      %353 = vmatprep.subr.bf16.mxu0 0
      %354 = vmatpush1.bf16.xpose.msra.mxu0 0
      %355 = vmatprep.subr.bf16.mxu0 0
      %356 = vmatpush1.bf16.xpose.msra.mxu0 0
      %357 = vmatprep.subr.bf16.mxu0 0
      %358 = vmatpush1.bf16.xpose.msra.mxu0 0
      %359 = vmatprep.subr.bf16.mxu0 0
      %360 = vmatpush1.bf16.xpose.msra.mxu0 0
      %361 = vmatprep.subr.bf16.mxu0 0
      %362 = vmatpush1.bf16.xpose.msra.mxu0 0
      %363 = vmatprep.subr.bf16.mxu0 0
      %364 = vmatpush1.bf16.xpose.msra.mxu0 %v347
      %365 = vmatprep.subr.bf16.mxu0 0
      %366 = vmatpush2.bf16.xpose.msra.mxu0 0
      %367 = vmatprep.subr.bf16.mxu0 0
      %368 = vmatpush2.bf16.xpose.msra.mxu0 0
      %369 = vmatprep.subr.bf16.mxu0 0
      %370 = vmatpush2.bf16.xpose.msra.mxu0 0
      %371 = vmatprep.subr.bf16.mxu0 0
      %372 = vmatpush2.bf16.xpose.msra.mxu0 0
      %373 = vmatprep.subr.bf16.mxu0 0
      %374 = vmatpush2.bf16.xpose.msra.mxu0 0
      %375 = vmatprep.subr.bf16.mxu0 0
      %376 = vmatpush2.bf16.xpose.msra.mxu0 0
      %377 = vmatprep.subr.bf16.mxu0 0
      %378 = vmatpush2.bf16.xpose.msra.mxu0 0
      %379 = vmatprep.subr.bf16.mxu0 0
      %380 = vmatpush2.bf16.xpose.msra.mxu0 0
      %381 = vmatprep.mubr.bf16.mxu0 0
      %382 = vmatmul.mubr.bf16.gmra.mxu0 %v344
      %v383 = vpop.f32.mrf.mxu0
      %v384 = vadd.f32 0.0, %v383
      %v385 = vpop.f32.mrf.mxu0
      %v386 = vpop.f32.mrf.mxu0
      %v387 = vadd.f32 0.0, %v386
      %v388 = vpop.f32.mrf.mxu0
      %389 = vdwg.mxu0
      %v390 = vsel %vm331, %v384, -1e+30
      %v391 = vsel %vm331, %v387, -1e+30
      %v392 = vld [vmem:[#allocation2] sm:$0xff]
      %v393 = vld [vmem:[#allocation2 + $0x8] sm:$0xff]
      %v394 = vld [vmem:[#allocation3] sm:$0xff]
      %v395 = vld [vmem:[#allocation3 + $0x8] sm:$0xff]
      %v396 = vld [vmem:[#allocation4] sm:$0xff]
      %v397 = vld [vmem:[#allocation4 + $0x8] sm:$0xff]
      %vm398 = vcmask 130048
      %v399 = vsel %vm398, %v390, -inf
      %400 = vmax.xlane.f32.xlu0 %v399
      %v401 = vpop.xlane.xlu0 %400
      %v402 = vsel %vm398, %v391, -inf
      %403 = vmax.xlane.f32.xlu0 %v402
      %v404 = vpop.xlane.xlu0 %403
      %v405 = vmax.f32 %v392, %v401
      %v406 = vmax.f32 %v393, %v404
      %v407 = vsub.f32 %v392, %v405
      %v408 = vsub.f32 %v393, %v406
      %v409 = vmul.f32 %v407, 1.442695
      %v410 = vpow.pop %v409
      %v411 = vmul.f32 %v408, 1.442695
      %v412 = vpow.pop %v411
      %414 = vset.pattern.permute.xlu0 0
      %415 = vperm.xlu0 %414, %v405
      %v416 = vpop.permute.xlu0 %415
      %419 = vset.pattern.permute.xlu0 0
      %420 = vperm.xlu0 %419, %v406
      %v421 = vpop.permute.xlu0 %420
      %v423 = vsub.f32 %v390, %v416
      %v424 = vsub.f32 %v391, %v421
      %v425 = vmul.f32 %v423, 1.442695
      %v426 = vpow.pop %v425
      %v427 = vmul.f32 %v424, 1.442695
      %v428 = vpow.pop %v427
      %v429 = vpack.c.bf16 %v428, %v426
      %v432 = vunpack.c.l.b16 %v324
      %v433 = vunpack.c.l.b16 %v325
      %v434 = vpack.c.b16 %v433, %v432
      %v437 = vsel %vm398, %v429, 0
      %439 = vmatprep.subr.bf16.mxu0 0
      %440 = vmatpush1.bf16.msra.mxu0 0
      %441 = vmatprep.subr.bf16.mxu0 0
      %442 = vmatpush1.bf16.msra.mxu0 0
      %443 = vmatprep.subr.bf16.mxu0 0
      %444 = vmatpush1.bf16.msra.mxu0 0
      %445 = vmatprep.subr.bf16.mxu0 0
      %446 = vmatpush1.bf16.msra.mxu0 0
      %447 = vmatprep.subr.bf16.mxu0 0
      %448 = vmatpush1.bf16.msra.mxu0 0
      %449 = vmatprep.subr.bf16.mxu0 0
      %450 = vmatpush1.bf16.msra.mxu0 0
      %451 = vmatprep.subr.bf16.mxu0 0
      %452 = vmatpush1.bf16.msra.mxu0 0
      %453 = vmatprep.subr.bf16.mxu0 0
      %454 = vmatpush1.bf16.msra.mxu0 %v434
      %455 = vmatprep.subr.bf16.mxu0 0
      %456 = vmatpush2.bf16.msra.mxu0 0
      %457 = vmatprep.subr.bf16.mxu0 0
      %458 = vmatpush2.bf16.msra.mxu0 0
      %459 = vmatprep.subr.bf16.mxu0 0
      %460 = vmatpush2.bf16.msra.mxu0 0
      %461 = vmatprep.subr.bf16.mxu0 0
      %462 = vmatpush2.bf16.msra.mxu0 0
      %463 = vmatprep.subr.bf16.mxu0 0
      %464 = vmatpush2.bf16.msra.mxu0 0
      %465 = vmatprep.subr.bf16.mxu0 0
      %466 = vmatpush2.bf16.msra.mxu0 0
      %467 = vmatprep.subr.bf16.mxu0 0
      %468 = vmatpush2.bf16.msra.mxu0 0
      %469 = vmatprep.subr.bf16.mxu0 0
      %470 = vmatpush2.bf16.msra.mxu0 0
      %471 = vmatprep.mubr.bf16.mxu0 0
      %472 = vmatmul.mubr.bf16.gmra.mxu0 %v437
      %v473 = vpop.f32.mrf.mxu0
      %v474 = vadd.f32 0.0, %v473
      %v475 = vpop.f32.mrf.mxu0
      %v476 = vpop.f32.mrf.mxu0
      %v477 = vadd.f32 0.0, %v476
      %v478 = vpop.f32.mrf.mxu0
      %479 = vdwg.mxu0
      %vm480 = vcmask 7168
      %481 = vst.msk [vmem:[#allocation2] sm:$0xff] %vm480, %v405
      %482 = vst.msk [vmem:[#allocation2 + $0x8] sm:$0xff] %vm480, %v406
      %v483 = vmul.f32 %v410, %v394
      %v484 = vmul.f32 %v412, %v395
      %v485 = vsel %vm398, %v426, 0.0
      %486 = vadd.xlane.f32.xlu0 %v485
      %v487 = vpop.xlane.xlu0 %486
      %v488 = vsel %vm398, %v428, 0.0
      %489 = vadd.xlane.f32.xlu0 %v488
      %v490 = vpop.xlane.xlu0 %489
      %v491 = vadd.f32 %v483, %v487
      %v492 = vadd.f32 %v484, %v490
      %493 = vst.msk [vmem:[#allocation3] sm:$0xff] %vm480, %v491
      %494 = vst.msk [vmem:[#allocation3 + $0x8] sm:$0xff] %vm480, %v492
      %496 = vset.pattern.permute.xlu0 0
      %497 = vperm.xlu0 %496, %v410
      %v498 = vpop.permute.xlu0 %497
      %501 = vset.pattern.permute.xlu0 0
      %502 = vperm.xlu0 %501, %v412
      %v503 = vpop.permute.xlu0 %502
      %v505 = vmul.f32 %v498, %v396
      %v506 = vmul.f32 %v503, %v397
      %v507 = vadd.f32 %v505, %v474
      %v508 = vadd.f32 %v506, %v477
      %509 = vst.msk [vmem:[#allocation4] sm:$0xff] %vm342, %v507
      %510 = vst.msk [vmem:[#allocation4 + $0x8] sm:$0xff] %vm342, %v508
      %511 = vrot.lane.b32.xlu0 %v336, 120
      %v512 = vpop.permute.xlu0 %511
      %513 = vrot.lane.b32.xlu0 %v341, 120
      %v514 = vpop.permute.xlu0 %513
      %v516 = vsel %vm342, %v512, 0
      %v519 = vsel %vm342, %v514, 0
      %521 = vmatprep.subr.bf16.mxu0 0
      %522 = vmatpush1.bf16.xpose.msra.mxu0 0
      %523 = vmatprep.subr.bf16.mxu0 0
      %524 = vmatpush1.bf16.xpose.msra.mxu0 0
      %525 = vmatprep.subr.bf16.mxu0 0
      %526 = vmatpush1.bf16.xpose.msra.mxu0 0
      %527 = vmatprep.subr.bf16.mxu0 0
      %528 = vmatpush1.bf16.xpose.msra.mxu0 0
      %529 = vmatprep.subr.bf16.mxu0 0
      %530 = vmatpush1.bf16.xpose.msra.mxu0 0
      %531 = vmatprep.subr.bf16.mxu0 0
      %532 = vmatpush1.bf16.xpose.msra.mxu0 0
      %533 = vmatprep.subr.bf16.mxu0 0
      %534 = vmatpush1.bf16.xpose.msra.mxu0 0
      %535 = vmatprep.subr.bf16.mxu0 0
      %536 = vmatpush1.bf16.xpose.msra.mxu0 %v519
      %537 = vmatprep.subr.bf16.mxu0 0
      %538 = vmatpush2.bf16.xpose.msra.mxu0 0
      %539 = vmatprep.subr.bf16.mxu0 0
      %540 = vmatpush2.bf16.xpose.msra.mxu0 0
      %541 = vmatprep.subr.bf16.mxu0 0
      %542 = vmatpush2.bf16.xpose.msra.mxu0 0
      %543 = vmatprep.subr.bf16.mxu0 0
      %544 = vmatpush2.bf16.xpose.msra.mxu0 0
      %545 = vmatprep.subr.bf16.mxu0 0
      %546 = vmatpush2.bf16.xpose.msra.mxu0 0
      %547 = vmatprep.subr.bf16.mxu0 0
      %548 = vmatpush2.bf16.xpose.msra.mxu0 0
      %549 = vmatprep.subr.bf16.mxu0 0
      %550 = vmatpush2.bf16.xpose.msra.mxu0 0
      %551 = vmatprep.subr.bf16.mxu0 0
      %552 = vmatpush2.bf16.xpose.msra.mxu0 0
      %553 = vmatprep.mubr.bf16.mxu0 0
      %554 = vmatmul.mubr.bf16.gmra.mxu0 %v516
      %v555 = vpop.f32.mrf.mxu0
      %v556 = vadd.f32 0.0, %v555
      %v557 = vpop.f32.mrf.mxu0
      %v558 = vpop.f32.mrf.mxu0
      %v559 = vadd.f32 0.0, %v558
      %v560 = vpop.f32.mrf.mxu0
      %561 = vdwg.mxu0
      %v562 = vsel %vm331, %v556, -1e+30
      %v563 = vsel %vm331, %v559, -1e+30
      %s564 = scalar_lea.vmem [#allocation2], 16
      %v565 = vld [vmem:[%s564] sm:$0xff]
      %v566 = vld [vmem:[%s564 + $0x8] sm:$0xff]
      %s567 = scalar_lea.vmem [#allocation3], 16
      %v568 = vld [vmem:[%s567] sm:$0xff]
      %v569 = vld [vmem:[%s567 + $0x8] sm:$0xff]
      %s570 = scalar_lea.vmem [#allocation4], 16
      %v571 = vld [vmem:[%s570] sm:$0xff]
      %v572 = vld [vmem:[%s570 + $0x8] sm:$0xff]
      %v573 = vsel %vm398, %v562, -inf
      %574 = vmax.xlane.f32.xlu0 %v573
      %v575 = vpop.xlane.xlu0 %574
      %v576 = vsel %vm398, %v563, -inf
      %577 = vmax.xlane.f32.xlu0 %v576
      %v578 = vpop.xlane.xlu0 %577
      %v579 = vmax.f32 %v565, %v575
      %v580 = vmax.f32 %v566, %v578
      %v581 = vsub.f32 %v565, %v579
      %v582 = vsub.f32 %v566, %v580
      %v583 = vmul.f32 %v581, 1.442695
      %v584 = vpow.pop %v583
      %v585 = vmul.f32 %v582, 1.442695
      %v586 = vpow.pop %v585
      %588 = vset.pattern.permute.xlu0 0
      %589 = vperm.xlu0 %588, %v579
      %v590 = vpop.permute.xlu0 %589
      %593 = vset.pattern.permute.xlu0 0
      %594 = vperm.xlu0 %593, %v580
      %v595 = vpop.permute.xlu0 %594
      %v597 = vsub.f32 %v562, %v590
      %v598 = vsub.f32 %v563, %v595
      %v599 = vmul.f32 %v597, 1.442695
      %v600 = vpow.pop %v599
      %v601 = vmul.f32 %v598, 1.442695
      %v602 = vpow.pop %v601
      %v603 = vpack.c.bf16 %v602, %v600
      %604 = vrot.lane.b32.xlu0 %v434, 120
      %v605 = vpop.permute.xlu0 %604
      %v608 = vsel %vm398, %v603, 0
      %610 = vmatprep.subr.bf16.mxu0 0
      %611 = vmatpush1.bf16.msra.mxu0 0
      %612 = vmatprep.subr.bf16.mxu0 0
      %613 = vmatpush1.bf16.msra.mxu0 0
      %614 = vmatprep.subr.bf16.mxu0 0
      %615 = vmatpush1.bf16.msra.mxu0 0
      %616 = vmatprep.subr.bf16.mxu0 0
      %617 = vmatpush1.bf16.msra.mxu0 0
      %618 = vmatprep.subr.bf16.mxu0 0
      %619 = vmatpush1.bf16.msra.mxu0 0
      %620 = vmatprep.subr.bf16.mxu0 0
      %621 = vmatpush1.bf16.msra.mxu0 0
      %622 = vmatprep.subr.bf16.mxu0 0
      %623 = vmatpush1.bf16.msra.mxu0 0
      %624 = vmatprep.subr.bf16.mxu0 0
      %625 = vmatpush1.bf16.msra.mxu0 %v605
      %626 = vmatprep.subr.bf16.mxu0 0
      %627 = vmatpush2.bf16.msra.mxu0 0
      %628 = vmatprep.subr.bf16.mxu0 0
      %629 = vmatpush2.bf16.msra.mxu0 0
      %630 = vmatprep.subr.bf16.mxu0 0
      %631 = vmatpush2.bf16.msra.mxu0 0
      %632 = vmatprep.subr.bf16.mxu0 0
      %633 = vmatpush2.bf16.msra.mxu0 0
      %634 = vmatprep.subr.bf16.mxu0 0
      %635 = vmatpush2.bf16.msra.mxu0 0
      %636 = vmatprep.subr.bf16.mxu0 0
      %637 = vmatpush2.bf16.msra.mxu0 0
      %638 = vmatprep.subr.bf16.mxu0 0
      %639 = vmatpush2.bf16.msra.mxu0 0
      %640 = vmatprep.subr.bf16.mxu0 0
      %641 = vmatpush2.bf16.msra.mxu0 0
      %642 = vmatprep.mubr.bf16.mxu0 0
      %643 = vmatmul.mubr.bf16.gmra.mxu0 %v608
      %v644 = vpop.f32.mrf.mxu0
      %v645 = vadd.f32 0.0, %v644
      %v646 = vpop.f32.mrf.mxu0
      %v647 = vpop.f32.mrf.mxu0
      %v648 = vadd.f32 0.0, %v647
      %v649 = vpop.f32.mrf.mxu0
      %650 = vdwg.mxu0
      %651 = vst.msk [vmem:[%s564] sm:$0xff] %vm480, %v579
      %652 = vst.msk [vmem:[%s564 + $0x8] sm:$0xff] %vm480, %v580
      %v653 = vmul.f32 %v584, %v568
      %v654 = vmul.f32 %v586, %v569
      %v655 = vsel %vm398, %v600, 0.0
      %656 = vadd.xlane.f32.xlu0 %v655
      %v657 = vpop.xlane.xlu0 %656
      %v658 = vsel %vm398, %v602, 0.0
      %659 = vadd.xlane.f32.xlu0 %v658
      %v660 = vpop.xlane.xlu0 %659
      %v661 = vadd.f32 %v653, %v657
      %v662 = vadd.f32 %v654, %v660
      %663 = vst.msk [vmem:[%s567] sm:$0xff] %vm480, %v661
      %664 = vst.msk [vmem:[%s567 + $0x8] sm:$0xff] %vm480, %v662
      %666 = vset.pattern.permute.xlu0 0
      %667 = vperm.xlu0 %666, %v584
      %v668 = vpop.permute.xlu0 %667
      %671 = vset.pattern.permute.xlu0 0
      %672 = vperm.xlu0 %671, %v586
      %v673 = vpop.permute.xlu0 %672
      %v675 = vmul.f32 %v668, %v571
      %v676 = vmul.f32 %v673, %v572
      %v677 = vadd.f32 %v675, %v645
      %v678 = vadd.f32 %v676, %v648
      %679 = vst.msk [vmem:[%s570] sm:$0xff] %vm342, %v677
      %680 = vst.msk [vmem:[%s570 + $0x8] sm:$0xff] %vm342, %v678
      %681 = vrot.lane.b32.xlu0 %v336, 112
      %v682 = vpop.permute.xlu0 %681
      %683 = vrot.lane.b32.xlu0 %v341, 112
      %v684 = vpop.permute.xlu0 %683
      %v686 = vsel %vm342, %v682, 0
      %v689 = vsel %vm342, %v684, 0
      %691 = vmatprep.subr.bf16.mxu0 0
      %692 = vmatpush1.bf16.xpose.msra.mxu0 0
      %693 = vmatprep.subr.bf16.mxu0 0
      %694 = vmatpush1.bf16.xpose.msra.mxu0 0
      %695 = vmatprep.subr.bf16.mxu0 0
      %696 = vmatpush1.bf16.xpose.msra.mxu0 0
      %697 = vmatprep.subr.bf16.mxu0 0
      %698 = vmatpush1.bf16.xpose.msra.mxu0 0
      %699 = vmatprep.subr.bf16.mxu0 0
      %700 = vmatpush1.bf16.xpose.msra.mxu0 0
      %701 = vmatprep.subr.bf16.mxu0 0
      %702 = vmatpush1.bf16.xpose.msra.mxu0 0
      %703 = vmatprep.subr.bf16.mxu0 0
      %704 = vmatpush1.bf16.xpose.msra.mxu0 0
      %705 = vmatprep.subr.bf16.mxu0 0
      %706 = vmatpush1.bf16.xpose.msra.mxu0 %v689
      %707 = vmatprep.subr.bf16.mxu0 0
      %708 = vmatpush2.bf16.xpose.msra.mxu0 0
      %709 = vmatprep.subr.bf16.mxu0 0
      %710 = vmatpush2.bf16.xpose.msra.mxu0 0
      %711 = vmatprep.subr.bf16.mxu0 0
      %712 = vmatpush2.bf16.xpose.msra.mxu0 0
      %713 = vmatprep.subr.bf16.mxu0 0
      %714 = vmatpush2.bf16.xpose.msra.mxu0 0
      %715 = vmatprep.subr.bf16.mxu0 0
      %716 = vmatpush2.bf16.xpose.msra.mxu0 0
      %717 = vmatprep.subr.bf16.mxu0 0
      %718 = vmatpush2.bf16.xpose.msra.mxu0 0
      %719 = vmatprep.subr.bf16.mxu0 0
      %720 = vmatpush2.bf16.xpose.msra.mxu0 0
      %721 = vmatprep.subr.bf16.mxu0 0
      %722 = vmatpush2.bf16.xpose.msra.mxu0 0
      %723 = vmatprep.mubr.bf16.mxu0 0
      %724 = vmatmul.mubr.bf16.gmra.mxu0 %v686
      %v725 = vpop.f32.mrf.mxu0
      %v726 = vadd.f32 0.0, %v725
      %v727 = vpop.f32.mrf.mxu0
      %v728 = vpop.f32.mrf.mxu0
      %v729 = vadd.f32 0.0, %v728
      %v730 = vpop.f32.mrf.mxu0
      %731 = vdwg.mxu0
      %v732 = vsel %vm331, %v726, -1e+30
      %v733 = vsel %vm331, %v729, -1e+30
      %s734 = scalar_lea.vmem [#allocation2], 32
      %v735 = vld [vmem:[%s734] sm:$0xff]
      %v736 = vld [vmem:[%s734 + $0x8] sm:$0xff]
      %s737 = scalar_lea.vmem [#allocation3], 32
      %v738 = vld [vmem:[%s737] sm:$0xff]
      %v739 = vld [vmem:[%s737 + $0x8] sm:$0xff]
      %s740 = scalar_lea.vmem [#allocation4], 32
      %v741 = vld [vmem:[%s740] sm:$0xff]
      %v742 = vld [vmem:[%s740 + $0x8] sm:$0xff]
      %v743 = vsel %vm398, %v732, -inf
      %744 = vmax.xlane.f32.xlu0 %v743
      %v745 = vpop.xlane.xlu0 %744
      %v746 = vsel %vm398, %v733, -inf
      %747 = vmax.xlane.f32.xlu0 %v746
      %v748 = vpop.xlane.xlu0 %747
      %v749 = vmax.f32 %v735, %v745
      %v750 = vmax.f32 %v736, %v748
      %v751 = vsub.f32 %v735, %v749
      %v752 = vsub.f32 %v736, %v750
      %v753 = vmul.f32 %v751, 1.442695
      %v754 = vpow.pop %v753
      %v755 = vmul.f32 %v752, 1.442695
      %v756 = vpow.pop %v755
      %758 = vset.pattern.permute.xlu0 0
      %759 = vperm.xlu0 %758, %v749
      %v760 = vpop.permute.xlu0 %759
      %763 = vset.pattern.permute.xlu0 0
      %764 = vperm.xlu0 %763, %v750
      %v765 = vpop.permute.xlu0 %764
      %v767 = vsub.f32 %v732, %v760
      %v768 = vsub.f32 %v733, %v765
      %v769 = vmul.f32 %v767, 1.442695
      %v770 = vpow.pop %v769
      %v771 = vmul.f32 %v768, 1.442695
      %v772 = vpow.pop %v771
      %v773 = vpack.c.bf16 %v772, %v770
      %774 = vrot.lane.b32.xlu0 %v434, 112
      %v775 = vpop.permute.xlu0 %774
      %v778 = vsel %vm398, %v773, 0
      %780 = vmatprep.subr.bf16.mxu0 0
      %781 = vmatpush1.bf16.msra.mxu0 0
      %782 = vmatprep.subr.bf16.mxu0 0
      %783 = vmatpush1.bf16.msra.mxu0 0
      %784 = vmatprep.subr.bf16.mxu0 0
      %785 = vmatpush1.bf16.msra.mxu0 0
      %786 = vmatprep.subr.bf16.mxu0 0
      %787 = vmatpush1.bf16.msra.mxu0 0
      %788 = vmatprep.subr.bf16.mxu0 0
      %789 = vmatpush1.bf16.msra.mxu0 0
      %790 = vmatprep.subr.bf16.mxu0 0
      %791 = vmatpush1.bf16.msra.mxu0 0
      %792 = vmatprep.subr.bf16.mxu0 0
      %793 = vmatpush1.bf16.msra.mxu0 0
      %794 = vmatprep.subr.bf16.mxu0 0
      %795 = vmatpush1.bf16.msra.mxu0 %v775
      %796 = vmatprep.subr.bf16.mxu0 0
      %797 = vmatpush2.bf16.msra.mxu0 0
      %798 = vmatprep.subr.bf16.mxu0 0
      %799 = vmatpush2.bf16.msra.mxu0 0
      %800 = vmatprep.subr.bf16.mxu0 0
      %801 = vmatpush2.bf16.msra.mxu0 0
      %802 = vmatprep.subr.bf16.mxu0 0
      %803 = vmatpush2.bf16.msra.mxu0 0
      %804 = vmatprep.subr.bf16.mxu0 0
      %805 = vmatpush2.bf16.msra.mxu0 0
      %806 = vmatprep.subr.bf16.mxu0 0
      %807 = vmatpush2.bf16.msra.mxu0 0
      %808 = vmatprep.subr.bf16.mxu0 0
      %809 = vmatpush2.bf16.msra.mxu0 0
      %810 = vmatprep.subr.bf16.mxu0 0
      %811 = vmatpush2.bf16.msra.mxu0 0
      %812 = vmatprep.mubr.bf16.mxu0 0
      %813 = vmatmul.mubr.bf16.gmra.mxu0 %v778
      %v814 = vpop.f32.mrf.mxu0
      %v815 = vadd.f32 0.0, %v814
      %v816 = vpop.f32.mrf.mxu0
      %v817 = vpop.f32.mrf.mxu0
      %v818 = vadd.f32 0.0, %v817
      %v819 = vpop.f32.mrf.mxu0
      %820 = vdwg.mxu0
      %821 = vst.msk [vmem:[%s734] sm:$0xff] %vm480, %v749
      %822 = vst.msk [vmem:[%s734 + $0x8] sm:$0xff] %vm480, %v750
      %v823 = vmul.f32 %v754, %v738
      %v824 = vmul.f32 %v756, %v739
      %v825 = vsel %vm398, %v770, 0.0
      %826 = vadd.xlane.f32.xlu0 %v825
      %v827 = vpop.xlane.xlu0 %826
      %v828 = vsel %vm398, %v772, 0.0
      %829 = vadd.xlane.f32.xlu0 %v828
      %v830 = vpop.xlane.xlu0 %829
      %v831 = vadd.f32 %v823, %v827
      %v832 = vadd.f32 %v824, %v830
      %833 = vst.msk [vmem:[%s737] sm:$0xff] %vm480, %v831
      %834 = vst.msk [vmem:[%s737 + $0x8] sm:$0xff] %vm480, %v832
      %836 = vset.pattern.permute.xlu0 0
      %837 = vperm.xlu0 %836, %v754
      %v838 = vpop.permute.xlu0 %837
      %841 = vset.pattern.permute.xlu0 0
      %842 = vperm.xlu0 %841, %v756
      %v843 = vpop.permute.xlu0 %842
      %v845 = vmul.f32 %v838, %v741
      %v846 = vmul.f32 %v843, %v742
      %v847 = vadd.f32 %v845, %v815
      %v848 = vadd.f32 %v846, %v818
      %849 = vst.msk [vmem:[%s740] sm:$0xff] %vm342, %v847
      %850 = vst.msk [vmem:[%s740 + $0x8] sm:$0xff] %vm342, %v848
      %851 = vrot.lane.b32.xlu0 %v336, 104
      %v852 = vpop.permute.xlu0 %851
      %853 = vrot.lane.b32.xlu0 %v341, 104
      %v854 = vpop.permute.xlu0 %853
      %v856 = vsel %vm342, %v852, 0
      %v859 = vsel %vm342, %v854, 0
      %861 = vmatprep.subr.bf16.mxu0 0
      %862 = vmatpush1.bf16.xpose.msra.mxu0 0
      %863 = vmatprep.subr.bf16.mxu0 0
      %864 = vmatpush1.bf16.xpose.msra.mxu0 0
      %865 = vmatprep.subr.bf16.mxu0 0
      %866 = vmatpush1.bf16.xpose.msra.mxu0 0
      %867 = vmatprep.subr.bf16.mxu0 0
      %868 = vmatpush1.bf16.xpose.msra.mxu0 0
      %869 = vmatprep.subr.bf16.mxu0 0
      %870 = vmatpush1.bf16.xpose.msra.mxu0 0
      %871 = vmatprep.subr.bf16.mxu0 0
      %872 = vmatpush1.bf16.xpose.msra.mxu0 0
      %873 = vmatprep.subr.bf16.mxu0 0
      %874 = vmatpush1.bf16.xpose.msra.mxu0 0
      %875 = vmatprep.subr.bf16.mxu0 0
      %876 = vmatpush1.bf16.xpose.msra.mxu0 %v859
      %877 = vmatprep.subr.bf16.mxu0 0
      %878 = vmatpush2.bf16.xpose.msra.mxu0 0
      %879 = vmatprep.subr.bf16.mxu0 0
      %880 = vmatpush2.bf16.xpose.msra.mxu0 0
      %881 = vmatprep.subr.bf16.mxu0 0
      %882 = vmatpush2.bf16.xpose.msra.mxu0 0
      %883 = vmatprep.subr.bf16.mxu0 0
      %884 = vmatpush2.bf16.xpose.msra.mxu0 0
      %885 = vmatprep.subr.bf16.mxu0 0
      %886 = vmatpush2.bf16.xpose.msra.mxu0 0
      %887 = vmatprep.subr.bf16.mxu0 0
      %888 = vmatpush2.bf16.xpose.msra.mxu0 0
      %889 = vmatprep.subr.bf16.mxu0 0
      %890 = vmatpush2.bf16.xpose.msra.mxu0 0
      %891 = vmatprep.subr.bf16.mxu0 0
      %892 = vmatpush2.bf16.xpose.msra.mxu0 0
      %893 = vmatprep.mubr.bf16.mxu0 0
      %894 = vmatmul.mubr.bf16.gmra.mxu0 %v856
      %v895 = vpop.f32.mrf.mxu0
      %v896 = vadd.f32 0.0, %v895
      %v897 = vpop.f32.mrf.mxu0
      %v898 = vpop.f32.mrf.mxu0
      %v899 = vadd.f32 0.0, %v898
      %v900 = vpop.f32.mrf.mxu0
      %901 = vdwg.mxu0
      %v902 = vsel %vm331, %v896, -1e+30
      %v903 = vsel %vm331, %v899, -1e+30
      %s904 = scalar_lea.vmem [#allocation2], 48
      %v905 = vld [vmem:[%s904] sm:$0xff]
      %v906 = vld [vmem:[%s904 + $0x8] sm:$0xff]
      %s907 = scalar_lea.vmem [#allocation3], 48
      %v908 = vld [vmem:[%s907] sm:$0xff]
      %v909 = vld [vmem:[%s907 + $0x8] sm:$0xff]
      %s910 = scalar_lea.vmem [#allocation4], 48
      %v911 = vld [vmem:[%s910] sm:$0xff]
      %v912 = vld [vmem:[%s910 + $0x8] sm:$0xff]
      %v913 = vsel %vm398, %v902, -inf
      %914 = vmax.xlane.f32.xlu0 %v913
      %v915 = vpop.xlane.xlu0 %914
      %v916 = vsel %vm398, %v903, -inf
      %917 = vmax.xlane.f32.xlu0 %v916
      %v918 = vpop.xlane.xlu0 %917
      %v919 = vmax.f32 %v905, %v915
      %v920 = vmax.f32 %v906, %v918
      %v921 = vsub.f32 %v905, %v919
      %v922 = vsub.f32 %v906, %v920
      %v923 = vmul.f32 %v921, 1.442695
      %v924 = vpow.pop %v923
      %v925 = vmul.f32 %v922, 1.442695
      %v926 = vpow.pop %v925
      %928 = vset.pattern.permute.xlu0 0
      %929 = vperm.xlu0 %928, %v919
      %v930 = vpop.permute.xlu0 %929
      %933 = vset.pattern.permute.xlu0 0
      %934 = vperm.xlu0 %933, %v920
      %v935 = vpop.permute.xlu0 %934
      %v937 = vsub.f32 %v902, %v930
      %v938 = vsub.f32 %v903, %v935
      %v939 = vmul.f32 %v937, 1.442695
      %v940 = vpow.pop %v939
      %v941 = vmul.f32 %v938, 1.442695
      %v942 = vpow.pop %v941
      %v943 = vpack.c.bf16 %v942, %v940
      %944 = vrot.lane.b32.xlu0 %v434, 104
      %v945 = vpop.permute.xlu0 %944
      %v948 = vsel %vm398, %v943, 0
      %950 = vmatprep.subr.bf16.mxu0 0
      %951 = vmatpush1.bf16.msra.mxu0 0
      %952 = vmatprep.subr.bf16.mxu0 0
      %953 = vmatpush1.bf16.msra.mxu0 0
      %954 = vmatprep.subr.bf16.mxu0 0
      %955 = vmatpush1.bf16.msra.mxu0 0
      %956 = vmatprep.subr.bf16.mxu0 0
      %957 = vmatpush1.bf16.msra.mxu0 0
      %958 = vmatprep.subr.bf16.mxu0 0
      %959 = vmatpush1.bf16.msra.mxu0 0
      %960 = vmatprep.subr.bf16.mxu0 0
      %961 = vmatpush1.bf16.msra.mxu0 0
      %962 = vmatprep.subr.bf16.mxu0 0
      %963 = vmatpush1.bf16.msra.mxu0 0
      %964 = vmatprep.subr.bf16.mxu0 0
      %965 = vmatpush1.bf16.msra.mxu0 %v945
      %966 = vmatprep.subr.bf16.mxu0 0
      %967 = vmatpush2.bf16.msra.mxu0 0
      %968 = vmatprep.subr.bf16.mxu0 0
      %969 = vmatpush2.bf16.msra.mxu0 0
      %970 = vmatprep.subr.bf16.mxu0 0
      %971 = vmatpush2.bf16.msra.mxu0 0
      %972 = vmatprep.subr.bf16.mxu0 0
      %973 = vmatpush2.bf16.msra.mxu0 0
      %974 = vmatprep.subr.bf16.mxu0 0
      %975 = vmatpush2.bf16.msra.mxu0 0
      %976 = vmatprep.subr.bf16.mxu0 0
      %977 = vmatpush2.bf16.msra.mxu0 0
      %978 = vmatprep.subr.bf16.mxu0 0
      %979 = vmatpush2.bf16.msra.mxu0 0
      %980 = vmatprep.subr.bf16.mxu0 0
      %981 = vmatpush2.bf16.msra.mxu0 0
      %982 = vmatprep.mubr.bf16.mxu0 0
      %983 = vmatmul.mubr.bf16.gmra.mxu0 %v948
      %v984 = vpop.f32.mrf.mxu0
      %v985 = vadd.f32 0.0, %v984
      %v986 = vpop.f32.mrf.mxu0
      %v987 = vpop.f32.mrf.mxu0
      %v988 = vadd.f32 0.0, %v987
      %v989 = vpop.f32.mrf.mxu0
      %990 = vdwg.mxu0
      %991 = vst.msk [vmem:[%s904] sm:$0xff] %vm480, %v919
      %992 = vst.msk [vmem:[%s904 + $0x8] sm:$0xff] %vm480, %v920
      %v993 = vmul.f32 %v924, %v908
      %v994 = vmul.f32 %v926, %v909
      %v995 = vsel %vm398, %v940, 0.0
      %996 = vadd.xlane.f32.xlu0 %v995
      %v997 = vpop.xlane.xlu0 %996
      %v998 = vsel %vm398, %v942, 0.0
      %999 = vadd.xlane.f32.xlu0 %v998
      %v1000 = vpop.xlane.xlu0 %999
      %v1001 = vadd.f32 %v993, %v997
      %v1002 = vadd.f32 %v994, %v1000
      %1003 = vst.msk [vmem:[%s907] sm:$0xff] %vm480, %v1001
      %1004 = vst.msk [vmem:[%s907 + $0x8] sm:$0xff] %vm480, %v1002
      %1006 = vset.pattern.permute.xlu0 0
      %1007 = vperm.xlu0 %1006, %v924
      %v1008 = vpop.permute.xlu0 %1007
      %1011 = vset.pattern.permute.xlu0 0
      %1012 = vperm.xlu0 %1011, %v926
      %v1013 = vpop.permute.xlu0 %1012
      %v1015 = vmul.f32 %v1008, %v911
      %v1016 = vmul.f32 %v1013, %v912
      %v1017 = vadd.f32 %v1015, %v985
      %v1018 = vadd.f32 %v1016, %v988
      %1019 = vst.msk [vmem:[%s910] sm:$0xff] %vm342, %v1017
      %1020 = vst.msk [vmem:[%s910 + $0x8] sm:$0xff] %vm342, %v1018
      // Predicated region
      $region37: #{mha_forward.6} parent=31 // pred_check
        %p1021 = pneg %p290
      $region38: #{mha_forward.6} parent=31 // pred_check_branch
        %1023 = sbr.rel (%p1021) target = $region40
      $region39: #{mha_forward.6} parent=31 // pred_region
        %v1024 = vld [vmem:[#allocation3] sm:$0xff]
        %v1025 = vld [vmem:[#allocation3 + $0x8] sm:$0xff]
        %v1026 = vrcp.pop %v1024
        %v1027 = vrcp.pop %v1025
        %v1028 = vld [vmem:[#allocation4] sm:$0xff]
        %v1029 = vld [vmem:[#allocation4 + $0x8] sm:$0xff]
        %1031 = vset.pattern.permute.xlu0 0
        %1032 = vperm.xlu0 %1031, %v1026
        %v1033 = vpop.permute.xlu0 %1032
        %1036 = vset.pattern.permute.xlu0 0
        %1037 = vperm.xlu0 %1036, %v1027
        %v1038 = vpop.permute.xlu0 %1037
        %v1040 = vmul.f32 %v1028, %v1033
        %v1041 = vmul.f32 %v1029, %v1038
        %v1042 = vld [vmem:[%s567] sm:$0xff]
        %v1043 = vld [vmem:[%s567 + $0x8] sm:$0xff]
        %v1044 = vrcp.pop %v1042
        %v1045 = vrcp.pop %v1043
        %v1046 = vld [vmem:[%s570] sm:$0xff]
        %v1047 = vld [vmem:[%s570 + $0x8] sm:$0xff]
        %1049 = vset.pattern.permute.xlu0 0
        %1050 = vperm.xlu0 %1049, %v1044
        %v1051 = vpop.permute.xlu0 %1050
        %1054 = vset.pattern.permute.xlu0 0
        %1055 = vperm.xlu0 %1054, %v1045
        %v1056 = vpop.permute.xlu0 %1055
        %v1058 = vmul.f32 %v1046, %v1051
        %v1059 = vmul.f32 %v1047, %v1056
        %v1060 = vld [vmem:[%s737] sm:$0xff]
        %v1061 = vld [vmem:[%s737 + $0x8] sm:$0xff]
        %v1062 = vrcp.pop %v1060
        %v1063 = vrcp.pop %v1061
        %v1064 = vld [vmem:[%s740] sm:$0xff]
        %v1065 = vld [vmem:[%s740 + $0x8] sm:$0xff]
        %1067 = vset.pattern.permute.xlu0 0
        %1068 = vperm.xlu0 %1067, %v1062
        %v1069 = vpop.permute.xlu0 %1068
        %1072 = vset.pattern.permute.xlu0 0
        %1073 = vperm.xlu0 %1072, %v1063
        %v1074 = vpop.permute.xlu0 %1073
        %v1076 = vmul.f32 %v1064, %v1069
        %v1077 = vmul.f32 %v1065, %v1074
        %v1078 = vld [vmem:[%s907] sm:$0xff]
        %v1079 = vld [vmem:[%s907 + $0x8] sm:$0xff]
        %v1080 = vrcp.pop %v1078
        %v1081 = vrcp.pop %v1079
        %v1082 = vld [vmem:[%s910] sm:$0xff]
        %v1083 = vld [vmem:[%s910 + $0x8] sm:$0xff]
        %1085 = vset.pattern.permute.xlu0 0
        %1086 = vperm.xlu0 %1085, %v1080
        %v1087 = vpop.permute.xlu0 %1086
        %1090 = vset.pattern.permute.xlu0 0
        %1091 = vperm.xlu0 %1090, %v1081
        %v1092 = vpop.permute.xlu0 %1091
        %v1094 = vmul.f32 %v1082, %v1087
        %v1095 = vmul.f32 %v1083, %v1092
        %1098 = vrot.lane.b32.xlu0 %v1058, 8
        %v1099 = vpop.permute.xlu0 %1098
        %1100 = vrot.lane.b32.xlu0 %v1059, 8
        %v1101 = vpop.permute.xlu0 %1100
        %1106 = vrot.lane.b32.xlu0 %v1076, 16
        %v1107 = vpop.permute.xlu0 %1106
        %1108 = vrot.lane.b32.xlu0 %v1077, 16
        %v1109 = vpop.permute.xlu0 %1108
        %1114 = vrot.lane.b32.xlu0 %v1094, 24
        %v1115 = vpop.permute.xlu0 %1114
        %1116 = vrot.lane.b32.xlu0 %v1095, 24
        %v1117 = vpop.permute.xlu0 %1116
        %v1120 = vsel %vm342, %v1040, %v1099
        %v1121 = vsel %vm342, %v1041, %v1101
        %v1122 = vsel %vm398, %v1120, %v1107
        %v1123 = vsel %vm398, %v1121, %v1109
        %vm1124 = vcmask 195584
        %v1125 = vsel %vm1124, %v1122, %v1115
        %v1126 = vsel %vm1124, %v1123, %v1117
        %v1127 = vpack.c.bf16 %v1126, %v1125
        %v1129 = vunpack.c.l.b16 %v1127
        %v1130 = vunpack.c.h.b16 %v1127
        %v1131 = vpack.c.b16 %v1129, %v1129
        %v1132 = vpack.c.b16 %v1130, %v1130
        %vm1135 = vcmask 257024
        %1136 = vst.msk [vmem:[%s287] sm:$0xf] %vm1135, %v1131
        %1137 = vst.msk [vmem:[%s287 + $0x4] sm:$0xf] %vm1135, %v1132
      $region40: #{mha_forward.6} parent=31 // pred_fallthru
        _
      %s1138 = smul.u32 2, %s20
      %p1139 = scmp.lt.s32.totalorder %s19, 1
      %s1140 = scalar_select %p1139, %s19, 1
      %p1141 = scmp.lt.s32.totalorder %s1138, 1
      %s1142 = scalar_select %p1141, %s1138, 1
      %s1143 = smul.addr %s1140, 2
      %s1144 = sadd.s32 %s1142, %s1143
      %s1145 = smul.addr %s1144, 4
      %s1146 = scalar_lea.vmem %s3, %s1145
      // Predicated region
      $region41: #{mha_forward.6} parent=31 // pred_check
        %p1147 = pneg %p137
      $region42: #{mha_forward.6} parent=31 // pred_check_branch
        %1149 = sbr.rel (%p1147) target = $region44
      $region43: #{mha_forward.6} parent=31 // pred_region
        %s1150 = smul.u32 2, %s20
      $region44: #{mha_forward.6} parent=31 // pred_fallthru
        _
    $region32: #{mha_forward.6} parent=5 // pred_fallthru
      _
    %p1151 = scmp.le.s32.totalorder 2, %s9
    // Predicated region
    $region45: #{mha_forward.6} parent=5 // pred_check
      %p1152 = pneg %p1151
    $region46: #{mha_forward.6} parent=5 // pred_check_branch
      %1154 = sbr.rel (%p1152) target = $region48
    $region47: #{mha_forward.6} parent=5 // pred_region
      %s1155 = ssub.s32 %s9, 2
      // Predicated region
      $region49: #{mha_forward.6} parent=47 // pred_check
        %p1156 = pneg %p143
      $region50: #{mha_forward.6} parent=47 // pred_check_branch
        %1158 = sbr.rel (%p1156) target = $region52
      $region51: #{mha_forward.6} parent=47 // pred_region
        %s1159 = smul.u32 2, %s23
        %p1160 = scmp.lt.s32.totalorder %s22, 1
        %s1161 = scalar_select %p1160, %s22, 1
        %p1162 = scmp.lt.s32.totalorder %s1159, 1
        %s1163 = scalar_select %p1162, %s1159, 1
        %s1164 = smul.addr %s1161, 2
        %s1165 = sadd.s32 %s1163, %s1164
        %s1166 = smul.addr %s1165, 4
        %s1167 = scalar_lea.vmem %s3, %s1166
      $region52: #{mha_forward.6} parent=47 // pred_fallthru
        _
    $region48: #{mha_forward.6} parent=5 // pred_fallthru
      _
  $region6: #{mha_forward.6} parent=0 // loop_footer
    %s13 = sadd.s32 1, %s9
  $region7: #{mha_forward.6} parent=0 // loop_footer_branch
    %8 = sbr.rel target = $region3
  $region8: #{mha_forward.6} parent=0 // loop_exit
    _

</llo_original>
